<compile_context>
chip_gen: v6e
topology: v6e:2x2x1
jax: 0.10.0
libtpu: 0.0.40
codegen_flags: <defaults>
</compile_context>

<pallas_src>
import jax
import jax.numpy as jnp
from jax import lax
from jax.experimental import pallas as pl
from jax.experimental.pallas import tpu as pltpu  # noqa: F401  (not needed at these sizes)


# ----------------------------------------------------------------------------
# Fused Pallas kernel: all LSTM layers + linear head in one call
# ----------------------------------------------------------------------------
def _make_net_kernel(T, B, H, num_layers):
    """Build the fused kernel.

    Ref layout (all full-array VMEM blocks, no grid):
      refs[0]                  x        (T*B, D_in0)   time-major rows (t*B + b)
      refs[1+3l : 4+3l]        layer l: W_ih^T (D_in,4H), W_hh^T (H,4H), bias (1,4H)
      refs[-3], refs[-2]       W_lin^T (H, O), b_lin (1, O)
      refs[-1]                 out      (T*B, O)
    """
    H4 = 4 * H

    def kernel(*refs):
        x_ref = refs[0]
        layer_refs = refs[1:1 + 3 * num_layers]
        wlin_ref, blin_ref, out_ref = refs[1 + 3 * num_layers:]

        seq = x_ref[...].astype(jnp.float32)              # (T*B, D_in) current layer input

        for layer in range(num_layers):
            wih = layer_refs[3 * layer][...]              # (D_in, 4H)
            whh = layer_refs[3 * layer + 1][...]          # (H, 4H)
            b = layer_refs[3 * layer + 2][...]            # (1, 4H)

            # Hoisted input projection: one MXU matmul covers all T timesteps;
            # the bias broadcast is also hoisted out of the recurrence.
            xproj = jnp.dot(seq, wih,
                            preferred_element_type=jnp.float32) + b   # (T*B, 4H)

            h = jnp.zeros((B, H), jnp.float32)
            c = jnp.zeros((B, H), jnp.float32)
            h_list = []
            # Time recurrence fully unrolled in-kernel (T is a small static
            # trip count): no grid-step overhead, static slices only, and the
            # scheduler sees the whole serial chain.
            for t in range(T):
                gates = xproj[t * B:(t + 1) * B, :] + jnp.dot(
                    h, whh, preferred_element_type=jnp.float32)        # (B, 4H)

                # Two full-width EUP passes, then static lane slices.
                # PyTorch gate order: input, forget, cell(g), output.
                sig = jax.nn.sigmoid(gates)
                tnh = jnp.tanh(gates)
                i = sig[:, 0 * H:1 * H]
                f = sig[:, 1 * H:2 * H]
                o = sig[:, 3 * H:4 * H]
                g = tnh[:, 2 * H:3 * H]

                c = f * c + i * g
                h = o * jnp.tanh(c)
                h_list.append(h)

            seq = jnp.concatenate(h_list, axis=0)         # (T*B, H) -> next layer input

        # Final linear projection; one contiguous store of the whole output.
        out_ref[...] = (
            jnp.dot(seq, wlin_ref[...], preferred_element_type=jnp.float32)
            + blin_ref[...]
        ).astype(out_ref.dtype)

    return kernel


# ----------------------------------------------------------------------------
# Wrappers
# ----------------------------------------------------------------------------
def prepare_params(params):
    """One-time layout prep: transpose weights, sum biases (done once, not per call)."""
    layers = []
    for (w_ih, w_hh, b_ih, b_hh) in params["lstm"]:
        h4 = w_ih.shape[0]
        layers.append((
            jnp.asarray(w_ih, jnp.float32).T,                              # (D_in, 4H)
            jnp.asarray(w_hh, jnp.float32).T,                              # (H, 4H)
            (jnp.asarray(b_ih, jnp.float32)
             + jnp.asarray(b_hh, jnp.float32)).reshape(1, h4),             # (1, 4H)
        ))
    out_size, _ = params["linear_w"].shape
    return {
        "layers": layers,
        "linear_w_t": jnp.asarray(params["linear_w"], jnp.float32).T,      # (H, O)
        "linear_b2": jnp.asarray(params["linear_b"], jnp.float32).reshape(1, out_size),
    }


@jax.jit
def net_forward(x_btd, prep):
    """Equivalent of Net.forward(x): x (B, T, input_size) -> (B, T, output_size)."""
    B, T, D = x_btd.shape
    num_layers = len(prep["layers"])
    H = prep["layers"][0][1].shape[0]
    O = prep["linear_w_t"].shape[1]

    # time-major, flattened: row index = t*B + b
    x2d = jnp.transpose(x_btd, (1, 0, 2)).reshape(T * B, D)

    in_arrays = [x2d]
    in_specs = [pl.BlockSpec((T * B, D), lambda: (0, 0))]
    for (wih_t, whh_t, bias) in prep["layers"]:
        in_arrays += [wih_t, whh_t, bias]
        in_specs += [
            pl.BlockSpec(wih_t.shape, lambda: (0, 0)),
            pl.BlockSpec(whh_t.shape, lambda: (0, 0)),
            pl.BlockSpec(bias.shape, lambda: (0, 0)),
        ]
    in_arrays += [prep["linear_w_t"], prep["linear_b2"]]
    in_specs += [
        pl.BlockSpec(prep["linear_w_t"].shape, lambda: (0, 0)),
        pl.BlockSpec(prep["linear_b2"].shape, lambda: (0, 0)),
    ]

    out2d = pl.pallas_call(
        _make_net_kernel(T, B, H, num_layers),
        out_shape=jax.ShapeDtypeStruct((T * B, O), jnp.float32),
        in_specs=in_specs,
        out_specs=pl.BlockSpec((T * B, O), lambda: (0, 0)),
    )(*in_arrays)

    return jnp.transpose(out2d.reshape(T, B, O), (1, 0, 2))   # (B, T, O)


# ----------------------------------------------------------------------------
# Deterministic parameter init (mimics PyTorch uniform(-1/sqrt(H), 1/sqrt(H)))
# ----------------------------------------------------------------------------
def init_params(key, input_size, hidden_size, num_layers, output_size):
    bound = 1.0 / jnp.sqrt(jnp.float32(hidden_size))
    params = {"lstm": []}
    for layer in range(num_layers):
        d_in = input_size if layer == 0 else hidden_size
        key, k1, k2, k3, k4 = jax.random.split(key, 5)
        w_ih = jax.random.uniform(k1, (4 * hidden_size, d_in), jnp.float32, -bound, bound)
        w_hh = jax.random.uniform(k2, (4 * hidden_size, hidden_size), jnp.float32, -bound, bound)
        b_ih = jax.random.uniform(k3, (4 * hidden_size,), jnp.float32, -bound, bound)
        b_hh = jax.random.uniform(k4, (4 * hidden_size,), jnp.float32, -bound, bound)
        params["lstm"].append((w_ih, w_hh, b_ih, b_hh))
    key, k5, k6 = jax.random.split(key, 3)
    params["linear_w"] = jax.random.uniform(k5, (output_size, hidden_size), jnp.float32, -bound, bound)
    params["linear_b"] = jax.random.uniform(k6, (output_size,), jnp.float32, -bound, bound)
    return params


# Pure-JAX reference (lax.scan) to sanity-check the kernel.
def _reference_forward(x_btd, params):
    def cell(carry, x_t, w_ih, w_hh, b):
        h, c = carry
        gates = x_t @ w_ih.T + h @ w_hh.T + b
        H = h.shape[-1]
        i = jax.nn.sigmoid(gates[:, :H])
        f = jax.nn.sigmoid(gates[:, H:2 * H])
        g = jnp.tanh(gates[:, 2 * H:3 * H])
        o = jax.nn.sigmoid(gates[:, 3 * H:])
        c = f * c + i * g
        h = o * jnp.tanh(c)
        return (h, c), h

    B = x_btd.shape[0]
    h_seq = jnp.transpose(x_btd, (1, 0, 2))
    for (w_ih, w_hh, b_ih, b_hh) in params["lstm"]:
        H = w_hh.shape[1]
        init = (jnp.zeros((B, H), jnp.float32), jnp.zeros((B, H), jnp.float32))
        _, h_seq = jax.lax.scan(
            lambda carry, xt: cell(carry, xt, w_ih, w_hh, b_ih + b_hh), init, h_seq)
    out = h_seq @ params["linear_w"].T + params["linear_b"]
    return jnp.transpose(out, (1, 0, 2))


if __name__ == "__main__":
    # config: input_size=8, hidden_size=32, lstm_layers=2, output_size=4
    B, T = 2, 8
    INPUT_SIZE, HIDDEN_SIZE, LSTM_LAYERS, OUTPUT_SIZE = 8, 32, 2, 4

    key = jax.random.PRNGKey(0)
    key, kx = jax.random.split(key)
    x = jax.random.normal(kx, (B, T, INPUT_SIZE), jnp.float32)
    params = init_params(key, INPUT_SIZE, HIDDEN_SIZE, LSTM_LAYERS, OUTPUT_SIZE)
    prep = prepare_params(params)

    out = net_forward(x, prep)
    out = jax.block_until_ready(out)

    ref = _reference_forward(x, params)
    assert out.shape == (B, T, OUTPUT_SIZE), out.shape
    assert jnp.allclose(out, ref, atol=2e-5, rtol=1e-5), "mismatch vs JAX reference"

    print("KERNEL_OK")
</pallas_src>

<mosaic_0001>
module attributes {stable_mosaic.version = 11 : i64} {
  func.func @kernel(%arg0: memref<16x8xf32, #tpu.memory_space<vmem>>, %arg1: memref<8x128xf32, #tpu.memory_space<vmem>>, %arg2: memref<32x128xf32, #tpu.memory_space<vmem>>, %arg3: memref<1x128xf32, #tpu.memory_space<vmem>>, %arg4: memref<32x128xf32, #tpu.memory_space<vmem>>, %arg5: memref<32x128xf32, #tpu.memory_space<vmem>>, %arg6: memref<1x128xf32, #tpu.memory_space<vmem>>, %arg7: memref<32x4xf32, #tpu.memory_space<vmem>>, %arg8: memref<1x4xf32, #tpu.memory_space<vmem>>, %arg9: memref<16x4xf32, #tpu.memory_space<vmem>>) attributes {dimension_semantics = [], scalar_prefetch = 0 : i64, scratch_operands = 0 : i64, tpu.core_type = #tpu.core_type<tc>} {
    %c0 = arith.constant 0 : index
    %c0_0 = arith.constant 0 : index
    %0 = vector.load %arg0[%c0, %c0_0] : memref<16x8xf32, #tpu.memory_space<vmem>>, vector<16x8xf32>
    %c0_1 = arith.constant 0 : index
    %c0_2 = arith.constant 0 : index
    %1 = vector.load %arg1[%c0_1, %c0_2] : memref<8x128xf32, #tpu.memory_space<vmem>>, vector<8x128xf32>
    %c0_3 = arith.constant 0 : index
    %c0_4 = arith.constant 0 : index
    %2 = vector.load %arg2[%c0_3, %c0_4] : memref<32x128xf32, #tpu.memory_space<vmem>>, vector<32x128xf32>
    %c0_5 = arith.constant 0 : index
    %c0_6 = arith.constant 0 : index
    %3 = vector.load %arg3[%c0_5, %c0_6] : memref<1x128xf32, #tpu.memory_space<vmem>>, vector<1x128xf32>
    %cst = arith.constant dense<0.000000e+00> : vector<16x128xf32>
    %4 = tpu.matmul %0, %1, %cst {dimension_numbers = #tpu.dot_dimension_numbers<[1], [0], [0], [1], [0, 0, 1, 1], [], []>} : vector<16x8xf32>, vector<8x128xf32>, vector<16x128xf32> -> vector<16x128xf32>
    %5 = vector.broadcast %3 : vector<1x128xf32> to vector<16x128xf32>
    %6 = arith.addf %4, %5 : vector<16x128xf32>
    %cst_7 = arith.constant 0.000000e+00 : f32
    %7 = vector.broadcast %cst_7 : f32 to vector<2x32xf32>
    %cst_8 = arith.constant 0.000000e+00 : f32
    %8 = vector.broadcast %cst_8 : f32 to vector<2x32xf32>
    %9 = vector.extract_strided_slice %6 {offsets = [0, 0], sizes = [2, 128], strides = [1, 1]} : vector<16x128xf32> to vector<2x128xf32>
    %cst_9 = arith.constant dense<0.000000e+00> : vector<2x128xf32>
    %10 = tpu.matmul %7, %2, %cst_9 {dimension_numbers = #tpu.dot_dimension_numbers<[1], [0], [0], [1], [0, 0, 1, 1], [], []>} : vector<2x32xf32>, vector<32x128xf32>, vector<2x128xf32> -> vector<2x128xf32>
    %11 = arith.addf %9, %10 : vector<2x128xf32>
    %12 = arith.negf %11 : vector<2x128xf32>
    %13 = math.exp %12 : vector<2x128xf32>
    %cst_10 = arith.constant 1.000000e+00 : f32
    %14 = vector.broadcast %cst_10 : f32 to vector<2x128xf32>
    %15 = arith.addf %14, %13 : vector<2x128xf32>
    %16 = arith.divf %14, %15 : vector<2x128xf32>
    %17 = math.tanh %11 : vector<2x128xf32>
    %18 = vector.extract_strided_slice %16 {offsets = [0, 0], sizes = [2, 32], strides = [1, 1]} : vector<2x128xf32> to vector<2x32xf32>
    %19 = vector.extract_strided_slice %16 {offsets = [0, 32], sizes = [2, 32], strides = [1, 1]} : vector<2x128xf32> to vector<2x32xf32>
    %20 = vector.extract_strided_slice %16 {offsets = [0, 96], sizes = [2, 32], strides = [1, 1]} : vector<2x128xf32> to vector<2x32xf32>
    %21 = vector.extract_strided_slice %17 {offsets = [0, 64], sizes = [2, 32], strides = [1, 1]} : vector<2x128xf32> to vector<2x32xf32>
    %22 = arith.mulf %19, %8 : vector<2x32xf32>
    %23 = arith.mulf %18, %21 : vector<2x32xf32>
    %24 = arith.addf %22, %23 : vector<2x32xf32>
    %25 = math.tanh %24 : vector<2x32xf32>
    %26 = arith.mulf %20, %25 : vector<2x32xf32>
    %27 = vector.extract_strided_slice %6 {offsets = [2, 0], sizes = [2, 128], strides = [1, 1]} : vector<16x128xf32> to vector<2x128xf32>
    %cst_11 = arith.constant dense<0.000000e+00> : vector<2x128xf32>
    %28 = tpu.matmul %26, %2, %cst_11 {dimension_numbers = #tpu.dot_dimension_numbers<[1], [0], [0], [1], [0, 0, 1, 1], [], []>} : vector<2x32xf32>, vector<32x128xf32>, vector<2x128xf32> -> vector<2x128xf32>
    %29 = arith.addf %27, %28 : vector<2x128xf32>
    %30 = arith.negf %29 : vector<2x128xf32>
    %31 = math.exp %30 : vector<2x128xf32>
    %cst_12 = arith.constant 1.000000e+00 : f32
    %32 = vector.broadcast %cst_12 : f32 to vector<2x128xf32>
    %33 = arith.addf %32, %31 : vector<2x128xf32>
    %34 = arith.divf %32, %33 : vector<2x128xf32>
    %35 = math.tanh %29 : vector<2x128xf32>
    %36 = vector.extract_strided_slice %34 {offsets = [0, 0], sizes = [2, 32], strides = [1, 1]} : vector<2x128xf32> to vector<2x32xf32>
    %37 = vector.extract_strided_slice %34 {offsets = [0, 32], sizes = [2, 32], strides = [1, 1]} : vector<2x128xf32> to vector<2x32xf32>
    %38 = vector.extract_strided_slice %34 {offsets = [0, 96], sizes = [2, 32], strides = [1, 1]} : vector<2x128xf32> to vector<2x32xf32>
    %39 = vector.extract_strided_slice %35 {offsets = [0, 64], sizes = [2, 32], strides = [1, 1]} : vector<2x128xf32> to vector<2x32xf32>
    %40 = arith.mulf %37, %24 : vector<2x32xf32>
    %41 = arith.mulf %36, %39 : vector<2x32xf32>
    %42 = arith.addf %40, %41 : vector<2x32xf32>
    %43 = math.tanh %42 : vector<2x32xf32>
    %44 = arith.mulf %38, %43 : vector<2x32xf32>
    %45 = vector.extract_strided_slice %6 {offsets = [4, 0], sizes = [2, 128], strides = [1, 1]} : vector<16x128xf32> to vector<2x128xf32>
    %cst_13 = arith.constant dense<0.000000e+00> : vector<2x128xf32>
    %46 = tpu.matmul %44, %2, %cst_13 {dimension_numbers = #tpu.dot_dimension_numbers<[1], [0], [0], [1], [0, 0, 1, 1], [], []>} : vector<2x32xf32>, vector<32x128xf32>, vector<2x128xf32> -> vector<2x128xf32>
    %47 = arith.addf %45, %46 : vector<2x128xf32>
    %48 = arith.negf %47 : vector<2x128xf32>
    %49 = math.exp %48 : vector<2x128xf32>
    %cst_14 = arith.constant 1.000000e+00 : f32
    %50 = vector.broadcast %cst_14 : f32 to vector<2x128xf32>
    %51 = arith.addf %50, %49 : vector<2x128xf32>
    %52 = arith.divf %50, %51 : vector<2x128xf32>
    %53 = math.tanh %47 : vector<2x128xf32>
    %54 = vector.extract_strided_slice %52 {offsets = [0, 0], sizes = [2, 32], strides = [1, 1]} : vector<2x128xf32> to vector<2x32xf32>
    %55 = vector.extract_strided_slice %52 {offsets = [0, 32], sizes = [2, 32], strides = [1, 1]} : vector<2x128xf32> to vector<2x32xf32>
    %56 = vector.extract_strided_slice %52 {offsets = [0, 96], sizes = [2, 32], strides = [1, 1]} : vector<2x128xf32> to vector<2x32xf32>
    %57 = vector.extract_strided_slice %53 {offsets = [0, 64], sizes = [2, 32], strides = [1, 1]} : vector<2x128xf32> to vector<2x32xf32>
    %58 = arith.mulf %55, %42 : vector<2x32xf32>
    %59 = arith.mulf %54, %57 : vector<2x32xf32>
    %60 = arith.addf %58, %59 : vector<2x32xf32>
    %61 = math.tanh %60 : vector<2x32xf32>
    %62 = arith.mulf %56, %61 : vector<2x32xf32>
    %63 = vector.extract_strided_slice %6 {offsets = [6, 0], sizes = [2, 128], strides = [1, 1]} : vector<16x128xf32> to vector<2x128xf32>
    %cst_15 = arith.constant dense<0.000000e+00> : vector<2x128xf32>
    %64 = tpu.matmul %62, %2, %cst_15 {dimension_numbers = #tpu.dot_dimension_numbers<[1], [0], [0], [1], [0, 0, 1, 1], [], []>} : vector<2x32xf32>, vector<32x128xf32>, vector<2x128xf32> -> vector<2x128xf32>
    %65 = arith.addf %63, %64 : vector<2x128xf32>
    %66 = arith.negf %65 : vector<2x128xf32>
    %67 = math.exp %66 : vector<2x128xf32>
    %cst_16 = arith.constant 1.000000e+00 : f32
    %68 = vector.broadcast %cst_16 : f32 to vector<2x128xf32>
    %69 = arith.addf %68, %67 : vector<2x128xf32>
    %70 = arith.divf %68, %69 : vector<2x128xf32>
    %71 = math.tanh %65 : vector<2x128xf32>
    %72 = vector.extract_strided_slice %70 {offsets = [0, 0], sizes = [2, 32], strides = [1, 1]} : vector<2x128xf32> to vector<2x32xf32>
    %73 = vector.extract_strided_slice %70 {offsets = [0, 32], sizes = [2, 32], strides = [1, 1]} : vector<2x128xf32> to vector<2x32xf32>
    %74 = vector.extract_strided_slice %70 {offsets = [0, 96], sizes = [2, 32], strides = [1, 1]} : vector<2x128xf32> to vector<2x32xf32>
    %75 = vector.extract_strided_slice %71 {offsets = [0, 64], sizes = [2, 32], strides = [1, 1]} : vector<2x128xf32> to vector<2x32xf32>
    %76 = arith.mulf %73, %60 : vector<2x32xf32>
    %77 = arith.mulf %72, %75 : vector<2x32xf32>
    %78 = arith.addf %76, %77 : vector<2x32xf32>
    %79 = math.tanh %78 : vector<2x32xf32>
    %80 = arith.mulf %74, %79 : vector<2x32xf32>
    %81 = vector.extract_strided_slice %6 {offsets = [8, 0], sizes = [2, 128], strides = [1, 1]} : vector<16x128xf32> to vector<2x128xf32>
    %cst_17 = arith.constant dense<0.000000e+00> : vector<2x128xf32>
    %82 = tpu.matmul %80, %2, %cst_17 {dimension_numbers = #tpu.dot_dimension_numbers<[1], [0], [0], [1], [0, 0, 1, 1], [], []>} : vector<2x32xf32>, vector<32x128xf32>, vector<2x128xf32> -> vector<2x128xf32>
    %83 = arith.addf %81, %82 : vector<2x128xf32>
    %84 = arith.negf %83 : vector<2x128xf32>
    %85 = math.exp %84 : vector<2x128xf32>
    %cst_18 = arith.constant 1.000000e+00 : f32
    %86 = vector.broadcast %cst_18 : f32 to vector<2x128xf32>
    %87 = arith.addf %86, %85 : vector<2x128xf32>
    %88 = arith.divf %86, %87 : vector<2x128xf32>
    %89 = math.tanh %83 : vector<2x128xf32>
    %90 = vector.extract_strided_slice %88 {offsets = [0, 0], sizes = [2, 32], strides = [1, 1]} : vector<2x128xf32> to vector<2x32xf32>
    %91 = vector.extract_strided_slice %88 {offsets = [0, 32], sizes = [2, 32], strides = [1, 1]} : vector<2x128xf32> to vector<2x32xf32>
    %92 = vector.extract_strided_slice %88 {offsets = [0, 96], sizes = [2, 32], strides = [1, 1]} : vector<2x128xf32> to vector<2x32xf32>
    %93 = vector.extract_strided_slice %89 {offsets = [0, 64], sizes = [2, 32], strides = [1, 1]} : vector<2x128xf32> to vector<2x32xf32>
    %94 = arith.mulf %91, %78 : vector<2x32xf32>
    %95 = arith.mulf %90, %93 : vector<2x32xf32>
    %96 = arith.addf %94, %95 : vector<2x32xf32>
    %97 = math.tanh %96 : vector<2x32xf32>
    %98 = arith.mulf %92, %97 : vector<2x32xf32>
    %99 = vector.extract_strided_slice %6 {offsets = [10, 0], sizes = [2, 128], strides = [1, 1]} : vector<16x128xf32> to vector<2x128xf32>
    %cst_19 = arith.constant dense<0.000000e+00> : vector<2x128xf32>
    %100 = tpu.matmul %98, %2, %cst_19 {dimension_numbers = #tpu.dot_dimension_numbers<[1], [0], [0], [1], [0, 0, 1, 1], [], []>} : vector<2x32xf32>, vector<32x128xf32>, vector<2x128xf32> -> vector<2x128xf32>
    %101 = arith.addf %99, %100 : vector<2x128xf32>
    %102 = arith.negf %101 : vector<2x128xf32>
    %103 = math.exp %102 : vector<2x128xf32>
    %cst_20 = arith.constant 1.000000e+00 : f32
    %104 = vector.broadcast %cst_20 : f32 to vector<2x128xf32>
    %105 = arith.addf %104, %103 : vector<2x128xf32>
    %106 = arith.divf %104, %105 : vector<2x128xf32>
    %107 = math.tanh %101 : vector<2x128xf32>
    %108 = vector.extract_strided_slice %106 {offsets = [0, 0], sizes = [2, 32], strides = [1, 1]} : vector<2x128xf32> to vector<2x32xf32>
    %109 = vector.extract_strided_slice %106 {offsets = [0, 32], sizes = [2, 32], strides = [1, 1]} : vector<2x128xf32> to vector<2x32xf32>
    %110 = vector.extract_strided_slice %106 {offsets = [0, 96], sizes = [2, 32], strides = [1, 1]} : vector<2x128xf32> to vector<2x32xf32>
    %111 = vector.extract_strided_slice %107 {offsets = [0, 64], sizes = [2, 32], strides = [1, 1]} : vector<2x128xf32> to vector<2x32xf32>
    %112 = arith.mulf %109, %96 : vector<2x32xf32>
    %113 = arith.mulf %108, %111 : vector<2x32xf32>
    %114 = arith.addf %112, %113 : vector<2x32xf32>
    %115 = math.tanh %114 : vector<2x32xf32>
    %116 = arith.mulf %110, %115 : vector<2x32xf32>
    %117 = vector.extract_strided_slice %6 {offsets = [12, 0], sizes = [2, 128], strides = [1, 1]} : vector<16x128xf32> to vector<2x128xf32>
    %cst_21 = arith.constant dense<0.000000e+00> : vector<2x128xf32>
    %118 = tpu.matmul %116, %2, %cst_21 {dimension_numbers = #tpu.dot_dimension_numbers<[1], [0], [0], [1], [0, 0, 1, 1], [], []>} : vector<2x32xf32>, vector<32x128xf32>, vector<2x128xf32> -> vector<2x128xf32>
    %119 = arith.addf %117, %118 : vector<2x128xf32>
    %120 = arith.negf %119 : vector<2x128xf32>
    %121 = math.exp %120 : vector<2x128xf32>
    %cst_22 = arith.constant 1.000000e+00 : f32
    %122 = vector.broadcast %cst_22 : f32 to vector<2x128xf32>
    %123 = arith.addf %122, %121 : vector<2x128xf32>
    %124 = arith.divf %122, %123 : vector<2x128xf32>
    %125 = math.tanh %119 : vector<2x128xf32>
    %126 = vector.extract_strided_slice %124 {offsets = [0, 0], sizes = [2, 32], strides = [1, 1]} : vector<2x128xf32> to vector<2x32xf32>
    %127 = vector.extract_strided_slice %124 {offsets = [0, 32], sizes = [2, 32], strides = [1, 1]} : vector<2x128xf32> to vector<2x32xf32>
    %128 = vector.extract_strided_slice %124 {offsets = [0, 96], sizes = [2, 32], strides = [1, 1]} : vector<2x128xf32> to vector<2x32xf32>
    %129 = vector.extract_strided_slice %125 {offsets = [0, 64], sizes = [2, 32], strides = [1, 1]} : vector<2x128xf32> to vector<2x32xf32>
    %130 = arith.mulf %127, %114 : vector<2x32xf32>
    %131 = arith.mulf %126, %129 : vector<2x32xf32>
    %132 = arith.addf %130, %131 : vector<2x32xf32>
    %133 = math.tanh %132 : vector<2x32xf32>
    %134 = arith.mulf %128, %133 : vector<2x32xf32>
    %135 = vector.extract_strided_slice %6 {offsets = [14, 0], sizes = [2, 128], strides = [1, 1]} : vector<16x128xf32> to vector<2x128xf32>
    %cst_23 = arith.constant dense<0.000000e+00> : vector<2x128xf32>
    %136 = tpu.matmul %134, %2, %cst_23 {dimension_numbers = #tpu.dot_dimension_numbers<[1], [0], [0], [1], [0, 0, 1, 1], [], []>} : vector<2x32xf32>, vector<32x128xf32>, vector<2x128xf32> -> vector<2x128xf32>
    %137 = arith.addf %135, %136 : vector<2x128xf32>
    %138 = arith.negf %137 : vector<2x128xf32>
    %139 = math.exp %138 : vector<2x128xf32>
    %cst_24 = arith.constant 1.000000e+00 : f32
    %140 = vector.broadcast %cst_24 : f32 to vector<2x128xf32>
    %141 = arith.addf %140, %139 : vector<2x128xf32>
    %142 = arith.divf %140, %141 : vector<2x128xf32>
    %143 = math.tanh %137 : vector<2x128xf32>
    %144 = vector.extract_strided_slice %142 {offsets = [0, 0], sizes = [2, 32], strides = [1, 1]} : vector<2x128xf32> to vector<2x32xf32>
    %145 = vector.extract_strided_slice %142 {offsets = [0, 32], sizes = [2, 32], strides = [1, 1]} : vector<2x128xf32> to vector<2x32xf32>
    %146 = vector.extract_strided_slice %142 {offsets = [0, 96], sizes = [2, 32], strides = [1, 1]} : vector<2x128xf32> to vector<2x32xf32>
    %147 = vector.extract_strided_slice %143 {offsets = [0, 64], sizes = [2, 32], strides = [1, 1]} : vector<2x128xf32> to vector<2x32xf32>
    %148 = arith.mulf %145, %132 : vector<2x32xf32>
    %149 = arith.mulf %144, %147 : vector<2x32xf32>
    %150 = arith.addf %148, %149 : vector<2x32xf32>
    %151 = math.tanh %150 : vector<2x32xf32>
    %152 = arith.mulf %146, %151 : vector<2x32xf32>
    %153 = tpu.concatenate %26, %44, %62, %80, %98, %116, %134, %152 in 0 : vector<2x32xf32>, vector<2x32xf32>, vector<2x32xf32>, vector<2x32xf32>, vector<2x32xf32>, vector<2x32xf32>, vector<2x32xf32>, vector<2x32xf32> -> vector<16x32xf32>
    %c0_25 = arith.constant 0 : index
    %c0_26 = arith.constant 0 : index
    %154 = vector.load %arg4[%c0_25, %c0_26] : memref<32x128xf32, #tpu.memory_space<vmem>>, vector<32x128xf32>
    %c0_27 = arith.constant 0 : index
    %c0_28 = arith.constant 0 : index
    %155 = vector.load %arg5[%c0_27, %c0_28] : memref<32x128xf32, #tpu.memory_space<vmem>>, vector<32x128xf32>
    %c0_29 = arith.constant 0 : index
    %c0_30 = arith.constant 0 : index
    %156 = vector.load %arg6[%c0_29, %c0_30] : memref<1x128xf32, #tpu.memory_space<vmem>>, vector<1x128xf32>
    %cst_31 = arith.constant dense<0.000000e+00> : vector<16x128xf32>
    %157 = tpu.matmul %153, %154, %cst_31 {dimension_numbers = #tpu.dot_dimension_numbers<[1], [0], [0], [1], [0, 0, 1, 1], [], []>} : vector<16x32xf32>, vector<32x128xf32>, vector<16x128xf32> -> vector<16x128xf32>
    %158 = vector.broadcast %156 : vector<1x128xf32> to vector<16x128xf32>
    %159 = arith.addf %157, %158 : vector<16x128xf32>
    %cst_32 = arith.constant 0.000000e+00 : f32
    %160 = vector.broadcast %cst_32 : f32 to vector<2x32xf32>
    %cst_33 = arith.constant 0.000000e+00 : f32
    %161 = vector.broadcast %cst_33 : f32 to vector<2x32xf32>
    %162 = vector.extract_strided_slice %159 {offsets = [0, 0], sizes = [2, 128], strides = [1, 1]} : vector<16x128xf32> to vector<2x128xf32>
    %cst_34 = arith.constant dense<0.000000e+00> : vector<2x128xf32>
    %163 = tpu.matmul %160, %155, %cst_34 {dimension_numbers = #tpu.dot_dimension_numbers<[1], [0], [0], [1], [0, 0, 1, 1], [], []>} : vector<2x32xf32>, vector<32x128xf32>, vector<2x128xf32> -> vector<2x128xf32>
    %164 = arith.addf %162, %163 : vector<2x128xf32>
    %165 = arith.negf %164 : vector<2x128xf32>
    %166 = math.exp %165 : vector<2x128xf32>
    %cst_35 = arith.constant 1.000000e+00 : f32
    %167 = vector.broadcast %cst_35 : f32 to vector<2x128xf32>
    %168 = arith.addf %167, %166 : vector<2x128xf32>
    %169 = arith.divf %167, %168 : vector<2x128xf32>
    %170 = math.tanh %164 : vector<2x128xf32>
    %171 = vector.extract_strided_slice %169 {offsets = [0, 0], sizes = [2, 32], strides = [1, 1]} : vector<2x128xf32> to vector<2x32xf32>
    %172 = vector.extract_strided_slice %169 {offsets = [0, 32], sizes = [2, 32], strides = [1, 1]} : vector<2x128xf32> to vector<2x32xf32>
    %173 = vector.extract_strided_slice %169 {offsets = [0, 96], sizes = [2, 32], strides = [1, 1]} : vector<2x128xf32> to vector<2x32xf32>
    %174 = vector.extract_strided_slice %170 {offsets = [0, 64], sizes = [2, 32], strides = [1, 1]} : vector<2x128xf32> to vector<2x32xf32>
    %175 = arith.mulf %172, %161 : vector<2x32xf32>
    %176 = arith.mulf %171, %174 : vector<2x32xf32>
    %177 = arith.addf %175, %176 : vector<2x32xf32>
    %178 = math.tanh %177 : vector<2x32xf32>
    %179 = arith.mulf %173, %178 : vector<2x32xf32>
    %180 = vector.extract_strided_slice %159 {offsets = [2, 0], sizes = [2, 128], strides = [1, 1]} : vector<16x128xf32> to vector<2x128xf32>
    %cst_36 = arith.constant dense<0.000000e+00> : vector<2x128xf32>
    %181 = tpu.matmul %179, %155, %cst_36 {dimension_numbers = #tpu.dot_dimension_numbers<[1], [0], [0], [1], [0, 0, 1, 1], [], []>} : vector<2x32xf32>, vector<32x128xf32>, vector<2x128xf32> -> vector<2x128xf32>
    %182 = arith.addf %180, %181 : vector<2x128xf32>
    %183 = arith.negf %182 : vector<2x128xf32>
    %184 = math.exp %183 : vector<2x128xf32>
    %cst_37 = arith.constant 1.000000e+00 : f32
    %185 = vector.broadcast %cst_37 : f32 to vector<2x128xf32>
    %186 = arith.addf %185, %184 : vector<2x128xf32>
    %187 = arith.divf %185, %186 : vector<2x128xf32>
    %188 = math.tanh %182 : vector<2x128xf32>
    %189 = vector.extract_strided_slice %187 {offsets = [0, 0], sizes = [2, 32], strides = [1, 1]} : vector<2x128xf32> to vector<2x32xf32>
    %190 = vector.extract_strided_slice %187 {offsets = [0, 32], sizes = [2, 32], strides = [1, 1]} : vector<2x128xf32> to vector<2x32xf32>
    %191 = vector.extract_strided_slice %187 {offsets = [0, 96], sizes = [2, 32], strides = [1, 1]} : vector<2x128xf32> to vector<2x32xf32>
    %192 = vector.extract_strided_slice %188 {offsets = [0, 64], sizes = [2, 32], strides = [1, 1]} : vector<2x128xf32> to vector<2x32xf32>
    %193 = arith.mulf %190, %177 : vector<2x32xf32>
    %194 = arith.mulf %189, %192 : vector<2x32xf32>
    %195 = arith.addf %193, %194 : vector<2x32xf32>
    %196 = math.tanh %195 : vector<2x32xf32>
    %197 = arith.mulf %191, %196 : vector<2x32xf32>
    %198 = vector.extract_strided_slice %159 {offsets = [4, 0], sizes = [2, 128], strides = [1, 1]} : vector<16x128xf32> to vector<2x128xf32>
    %cst_38 = arith.constant dense<0.000000e+00> : vector<2x128xf32>
    %199 = tpu.matmul %197, %155, %cst_38 {dimension_numbers = #tpu.dot_dimension_numbers<[1], [0], [0], [1], [0, 0, 1, 1], [], []>} : vector<2x32xf32>, vector<32x128xf32>, vector<2x128xf32> -> vector<2x128xf32>
    %200 = arith.addf %198, %199 : vector<2x128xf32>
    %201 = arith.negf %200 : vector<2x128xf32>
    %202 = math.exp %201 : vector<2x128xf32>
    %cst_39 = arith.constant 1.000000e+00 : f32
    %203 = vector.broadcast %cst_39 : f32 to vector<2x128xf32>
    %204 = arith.addf %203, %202 : vector<2x128xf32>
    %205 = arith.divf %203, %204 : vector<2x128xf32>
    %206 = math.tanh %200 : vector<2x128xf32>
    %207 = vector.extract_strided_slice %205 {offsets = [0, 0], sizes = [2, 32], strides = [1, 1]} : vector<2x128xf32> to vector<2x32xf32>
    %208 = vector.extract_strided_slice %205 {offsets = [0, 32], sizes = [2, 32], strides = [1, 1]} : vector<2x128xf32> to vector<2x32xf32>
    %209 = vector.extract_strided_slice %205 {offsets = [0, 96], sizes = [2, 32], strides = [1, 1]} : vector<2x128xf32> to vector<2x32xf32>
    %210 = vector.extract_strided_slice %206 {offsets = [0, 64], sizes = [2, 32], strides = [1, 1]} : vector<2x128xf32> to vector<2x32xf32>
    %211 = arith.mulf %208, %195 : vector<2x32xf32>
    %212 = arith.mulf %207, %210 : vector<2x32xf32>
    %213 = arith.addf %211, %212 : vector<2x32xf32>
    %214 = math.tanh %213 : vector<2x32xf32>
    %215 = arith.mulf %209, %214 : vector<2x32xf32>
    %216 = vector.extract_strided_slice %159 {offsets = [6, 0], sizes = [2, 128], strides = [1, 1]} : vector<16x128xf32> to vector<2x128xf32>
    %cst_40 = arith.constant dense<0.000000e+00> : vector<2x128xf32>
    %217 = tpu.matmul %215, %155, %cst_40 {dimension_numbers = #tpu.dot_dimension_numbers<[1], [0], [0], [1], [0, 0, 1, 1], [], []>} : vector<2x32xf32>, vector<32x128xf32>, vector<2x128xf32> -> vector<2x128xf32>
    %218 = arith.addf %216, %217 : vector<2x128xf32>
    %219 = arith.negf %218 : vector<2x128xf32>
    %220 = math.exp %219 : vector<2x128xf32>
    %cst_41 = arith.constant 1.000000e+00 : f32
    %221 = vector.broadcast %cst_41 : f32 to vector<2x128xf32>
    %222 = arith.addf %221, %220 : vector<2x128xf32>
    %223 = arith.divf %221, %222 : vector<2x128xf32>
    %224 = math.tanh %218 : vector<2x128xf32>
    %225 = vector.extract_strided_slice %223 {offsets = [0, 0], sizes = [2, 32], strides = [1, 1]} : vector<2x128xf32> to vector<2x32xf32>
    %226 = vector.extract_strided_slice %223 {offsets = [0, 32], sizes = [2, 32], strides = [1, 1]} : vector<2x128xf32> to vector<2x32xf32>
    %227 = vector.extract_strided_slice %223 {offsets = [0, 96], sizes = [2, 32], strides = [1, 1]} : vector<2x128xf32> to vector<2x32xf32>
    %228 = vector.extract_strided_slice %224 {offsets = [0, 64], sizes = [2, 32], strides = [1, 1]} : vector<2x128xf32> to vector<2x32xf32>
    %229 = arith.mulf %226, %213 : vector<2x32xf32>
    %230 = arith.mulf %225, %228 : vector<2x32xf32>
    %231 = arith.addf %229, %230 : vector<2x32xf32>
    %232 = math.tanh %231 : vector<2x32xf32>
    %233 = arith.mulf %227, %232 : vector<2x32xf32>
    %234 = vector.extract_strided_slice %159 {offsets = [8, 0], sizes = [2, 128], strides = [1, 1]} : vector<16x128xf32> to vector<2x128xf32>
    %cst_42 = arith.constant dense<0.000000e+00> : vector<2x128xf32>
    %235 = tpu.matmul %233, %155, %cst_42 {dimension_numbers = #tpu.dot_dimension_numbers<[1], [0], [0], [1], [0, 0, 1, 1], [], []>} : vector<2x32xf32>, vector<32x128xf32>, vector<2x128xf32> -> vector<2x128xf32>
    %236 = arith.addf %234, %235 : vector<2x128xf32>
    %237 = arith.negf %236 : vector<2x128xf32>
    %238 = math.exp %237 : vector<2x128xf32>
    %cst_43 = arith.constant 1.000000e+00 : f32
    %239 = vector.broadcast %cst_43 : f32 to vector<2x128xf32>
    %240 = arith.addf %239, %238 : vector<2x128xf32>
    %241 = arith.divf %239, %240 : vector<2x128xf32>
    %242 = math.tanh %236 : vector<2x128xf32>
    %243 = vector.extract_strided_slice %241 {offsets = [0, 0], sizes = [2, 32], strides = [1, 1]} : vector<2x128xf32> to vector<2x32xf32>
    %244 = vector.extract_strided_slice %241 {offsets = [0, 32], sizes = [2, 32], strides = [1, 1]} : vector<2x128xf32> to vector<2x32xf32>
    %245 = vector.extract_strided_slice %241 {offsets = [0, 96], sizes = [2, 32], strides = [1, 1]} : vector<2x128xf32> to vector<2x32xf32>
    %246 = vector.extract_strided_slice %242 {offsets = [0, 64], sizes = [2, 32], strides = [1, 1]} : vector<2x128xf32> to vector<2x32xf32>
    %247 = arith.mulf %244, %231 : vector<2x32xf32>
    %248 = arith.mulf %243, %246 : vector<2x32xf32>
    %249 = arith.addf %247, %248 : vector<2x32xf32>
    %250 = math.tanh %249 : vector<2x32xf32>
    %251 = arith.mulf %245, %250 : vector<2x32xf32>
    %252 = vector.extract_strided_slice %159 {offsets = [10, 0], sizes = [2, 128], strides = [1, 1]} : vector<16x128xf32> to vector<2x128xf32>
    %cst_44 = arith.constant dense<0.000000e+00> : vector<2x128xf32>
    %253 = tpu.matmul %251, %155, %cst_44 {dimension_numbers = #tpu.dot_dimension_numbers<[1], [0], [0], [1], [0, 0, 1, 1], [], []>} : vector<2x32xf32>, vector<32x128xf32>, vector<2x128xf32> -> vector<2x128xf32>
    %254 = arith.addf %252, %253 : vector<2x128xf32>
    %255 = arith.negf %254 : vector<2x128xf32>
    %256 = math.exp %255 : vector<2x128xf32>
    %cst_45 = arith.constant 1.000000e+00 : f32
    %257 = vector.broadcast %cst_45 : f32 to vector<2x128xf32>
    %258 = arith.addf %257, %256 : vector<2x128xf32>
    %259 = arith.divf %257, %258 : vector<2x128xf32>
    %260 = math.tanh %254 : vector<2x128xf32>
    %261 = vector.extract_strided_slice %259 {offsets = [0, 0], sizes = [2, 32], strides = [1, 1]} : vector<2x128xf32> to vector<2x32xf32>
    %262 = vector.extract_strided_slice %259 {offsets = [0, 32], sizes = [2, 32], strides = [1, 1]} : vector<2x128xf32> to vector<2x32xf32>
    %263 = vector.extract_strided_slice %259 {offsets = [0, 96], sizes = [2, 32], strides = [1, 1]} : vector<2x128xf32> to vector<2x32xf32>
    %264 = vector.extract_strided_slice %260 {offsets = [0, 64], sizes = [2, 32], strides = [1, 1]} : vector<2x128xf32> to vector<2x32xf32>
    %265 = arith.mulf %262, %249 : vector<2x32xf32>
    %266 = arith.mulf %261, %264 : vector<2x32xf32>
    %267 = arith.addf %265, %266 : vector<2x32xf32>
    %268 = math.tanh %267 : vector<2x32xf32>
    %269 = arith.mulf %263, %268 : vector<2x32xf32>
    %270 = vector.extract_strided_slice %159 {offsets = [12, 0], sizes = [2, 128], strides = [1, 1]} : vector<16x128xf32> to vector<2x128xf32>
    %cst_46 = arith.constant dense<0.000000e+00> : vector<2x128xf32>
    %271 = tpu.matmul %269, %155, %cst_46 {dimension_numbers = #tpu.dot_dimension_numbers<[1], [0], [0], [1], [0, 0, 1, 1], [], []>} : vector<2x32xf32>, vector<32x128xf32>, vector<2x128xf32> -> vector<2x128xf32>
    %272 = arith.addf %270, %271 : vector<2x128xf32>
    %273 = arith.negf %272 : vector<2x128xf32>
    %274 = math.exp %273 : vector<2x128xf32>
    %cst_47 = arith.constant 1.000000e+00 : f32
    %275 = vector.broadcast %cst_47 : f32 to vector<2x128xf32>
    %276 = arith.addf %275, %274 : vector<2x128xf32>
    %277 = arith.divf %275, %276 : vector<2x128xf32>
    %278 = math.tanh %272 : vector<2x128xf32>
    %279 = vector.extract_strided_slice %277 {offsets = [0, 0], sizes = [2, 32], strides = [1, 1]} : vector<2x128xf32> to vector<2x32xf32>
    %280 = vector.extract_strided_slice %277 {offsets = [0, 32], sizes = [2, 32], strides = [1, 1]} : vector<2x128xf32> to vector<2x32xf32>
    %281 = vector.extract_strided_slice %277 {offsets = [0, 96], sizes = [2, 32], strides = [1, 1]} : vector<2x128xf32> to vector<2x32xf32>
    %282 = vector.extract_strided_slice %278 {offsets = [0, 64], sizes = [2, 32], strides = [1, 1]} : vector<2x128xf32> to vector<2x32xf32>
    %283 = arith.mulf %280, %267 : vector<2x32xf32>
    %284 = arith.mulf %279, %282 : vector<2x32xf32>
    %285 = arith.addf %283, %284 : vector<2x32xf32>
    %286 = math.tanh %285 : vector<2x32xf32>
    %287 = arith.mulf %281, %286 : vector<2x32xf32>
    %288 = vector.extract_strided_slice %159 {offsets = [14, 0], sizes = [2, 128], strides = [1, 1]} : vector<16x128xf32> to vector<2x128xf32>
    %cst_48 = arith.constant dense<0.000000e+00> : vector<2x128xf32>
    %289 = tpu.matmul %287, %155, %cst_48 {dimension_numbers = #tpu.dot_dimension_numbers<[1], [0], [0], [1], [0, 0, 1, 1], [], []>} : vector<2x32xf32>, vector<32x128xf32>, vector<2x128xf32> -> vector<2x128xf32>
    %290 = arith.addf %288, %289 : vector<2x128xf32>
    %291 = arith.negf %290 : vector<2x128xf32>
    %292 = math.exp %291 : vector<2x128xf32>
    %cst_49 = arith.constant 1.000000e+00 : f32
    %293 = vector.broadcast %cst_49 : f32 to vector<2x128xf32>
    %294 = arith.addf %293, %292 : vector<2x128xf32>
    %295 = arith.divf %293, %294 : vector<2x128xf32>
    %296 = math.tanh %290 : vector<2x128xf32>
    %297 = vector.extract_strided_slice %295 {offsets = [0, 0], sizes = [2, 32], strides = [1, 1]} : vector<2x128xf32> to vector<2x32xf32>
    %298 = vector.extract_strided_slice %295 {offsets = [0, 32], sizes = [2, 32], strides = [1, 1]} : vector<2x128xf32> to vector<2x32xf32>
    %299 = vector.extract_strided_slice %295 {offsets = [0, 96], sizes = [2, 32], strides = [1, 1]} : vector<2x128xf32> to vector<2x32xf32>
    %300 = vector.extract_strided_slice %296 {offsets = [0, 64], sizes = [2, 32], strides = [1, 1]} : vector<2x128xf32> to vector<2x32xf32>
    %301 = arith.mulf %298, %285 : vector<2x32xf32>
    %302 = arith.mulf %297, %300 : vector<2x32xf32>
    %303 = arith.addf %301, %302 : vector<2x32xf32>
    %304 = math.tanh %303 : vector<2x32xf32>
    %305 = arith.mulf %299, %304 : vector<2x32xf32>
    %306 = tpu.concatenate %179, %197, %215, %233, %251, %269, %287, %305 in 0 : vector<2x32xf32>, vector<2x32xf32>, vector<2x32xf32>, vector<2x32xf32>, vector<2x32xf32>, vector<2x32xf32>, vector<2x32xf32>, vector<2x32xf32> -> vector<16x32xf32>
    %c0_50 = arith.constant 0 : index
    %c0_51 = arith.constant 0 : index
    %307 = vector.load %arg7[%c0_50, %c0_51] : memref<32x4xf32, #tpu.memory_space<vmem>>, vector<32x4xf32>
    %cst_52 = arith.constant dense<0.000000e+00> : vector<16x4xf32>
    %308 = tpu.matmul %306, %307, %cst_52 {dimension_numbers = #tpu.dot_dimension_numbers<[1], [0], [0], [1], [0, 0, 1, 1], [], []>} : vector<16x32xf32>, vector<32x4xf32>, vector<16x4xf32> -> vector<16x4xf32>
    %c0_53 = arith.constant 0 : index
    %c0_54 = arith.constant 0 : index
    %309 = vector.load %arg8[%c0_53, %c0_54] : memref<1x4xf32, #tpu.memory_space<vmem>>, vector<1x4xf32>
    %310 = vector.broadcast %309 : vector<1x4xf32> to vector<16x4xf32>
    %311 = arith.addf %308, %310 : vector<16x4xf32>
    %c0_55 = arith.constant 0 : index
    %c0_56 = arith.constant 0 : index
    %312 = vector.load %arg9[%c0_55, %c0_56] : memref<16x4xf32, #tpu.memory_space<vmem>>, vector<16x4xf32>
    tpu.vector_store %arg9[%c0_55, %c0_56], %311 {strides = array<i32>} : memref<16x4xf32, #tpu.memory_space<vmem>>, vector<16x4xf32>,
    return
  }
}

</mosaic_0001>

<llo_original>
// kernel: net_forward.1
$region0: #{net_forward.1}
  #allocation0 [shape = 'u32[]', space=smem, size = 0x4, offset = 0x4, fixed_abs, tag = 'smem constant byte address 0x4 - core index']
  #allocation1 [shape = 'u32[144,128]{1,0:T(1,128)}', space=vmem, size = 0x12000, scoped, tag = 'internal scratch']
  %s0 = inlined_call_operand.vmem [shape: f32[16,8], index: 0, kind: input, shape index: {}]
  %s1 = inlined_call_operand.vmem [shape: f32[8,128], index: 1, kind: input, shape index: {}]
  %s2 = inlined_call_operand.vmem [shape: f32[32,128], index: 2, kind: input, shape index: {}]
  %s3 = inlined_call_operand.vmem [shape: f32[1,128], index: 3, kind: input, shape index: {}]
  %s4 = inlined_call_operand.vmem [shape: f32[32,128], index: 4, kind: input, shape index: {}]
  %s5 = inlined_call_operand.hbm [shape: f32[32,128], index: 5, kind: input, shape index: {}]
  %s6 = inlined_call_operand.vmem [shape: f32[1,128], index: 6, kind: input, shape index: {}]
  %s7 = inlined_call_operand.vmem [shape: f32[32,4], index: 7, kind: input, shape index: {}]
  %s8 = inlined_call_operand.vmem [shape: f32[1,4], index: 8, kind: input, shape index: {}]
  %s9 = inlined_call_operand.vmem [shape: f32[16,4], index: 9, kind: output, shape index: {}]
  %s10 = sld [smem:[#allocation0]]
  $region50: #{net_forward.1} parent=0
    _
  %s12 = ssub.s32 1, %s10
  %s13 = scalar_select 0, %s12, %s10
  $region1: #{net_forward.1} parent=0
    #allocation2 [shape = 'u8[16384]{0}', space=vmem, size = 0x4000, scoped, tag = 'input window, operand 5, single buffered']
    #allocation3 [shape = 's32[1]{0}', space=sflag, size = 0x4, scoped, tag = 'scoped memory for net_forward.1']
    %14 = vsyncpa [#allocation3], 0
    // Predicated region
    $region2: #{net_forward.1} parent=1 // pred_check
      _
    $region3: #{net_forward.1} parent=1 // pred_check_branch
      %16 = sbr.rel (0) target = $region5
    $region4: #{net_forward.1} parent=1 // pred_region
      _
    $region5: #{net_forward.1} parent=1 // pred_fallthru
      _
    // Predicated region
    $region6: #{net_forward.1} parent=1 // pred_check
      _
    $region7: #{net_forward.1} parent=1 // pred_check_branch
      %18 = sbr.rel (0) target = $region9
    $region8: #{net_forward.1} parent=1 // pred_region
      _
    $region9: #{net_forward.1} parent=1 // pred_fallthru
      _
    // Predicated region
    $region10: #{net_forward.1} parent=1 // pred_check
      _
    $region11: #{net_forward.1} parent=1 // pred_check_branch
      %20 = sbr.rel (0) target = $region13
    $region12: #{net_forward.1} parent=1 // pred_region
      _
    $region13: #{net_forward.1} parent=1 // pred_fallthru
      _
    // Predicated region
    $region14: #{net_forward.1} parent=1 // pred_check
      _
    $region15: #{net_forward.1} parent=1 // pred_check_branch
      %22 = sbr.rel (0) target = $region17
    $region16: #{net_forward.1} parent=1 // pred_region
      _
    $region17: #{net_forward.1} parent=1 // pred_fallthru
      _
    // Predicated region
    $region18: #{net_forward.1} parent=1 // pred_check
      _
    $region19: #{net_forward.1} parent=1 // pred_check_branch
      %24 = sbr.rel (0) target = $region21
    $region20: #{net_forward.1} parent=1 // pred_region
      _
    $region21: #{net_forward.1} parent=1 // pred_fallthru
      _
    // Predicated region
    $region22: #{net_forward.1} parent=1 // pred_check
      _
    $region23: #{net_forward.1} parent=1 // pred_check_branch
      %26 = sbr.rel (0) target = $region25
    $region24: #{net_forward.1} parent=1 // pred_region
      %s28 = ssub.s32 512, 512
      %29 = vsyncadd [#allocation3], %s28
      %s30 = sshll.u32 [#allocation2], 4
      %s31 = int_to_ptr.vmem [resolvable:$true] %s30
      %36 = dma.hbm_to_vmem [thread:$0]  %s5, 512, %s31, [#allocation3], 128, 128, 8
    $region25: #{net_forward.1} parent=1 // pred_fallthru
      _
    // Predicated region
    $region26: #{net_forward.1} parent=1 // pred_check
      _
    $region27: #{net_forward.1} parent=1 // pred_check_branch
      %38 = sbr.rel (0) target = $region29
    $region28: #{net_forward.1} parent=1 // pred_region
      _
    $region29: #{net_forward.1} parent=1 // pred_fallthru
      _
    // Predicated region
    $region30: #{net_forward.1} parent=1 // pred_check
      _
    $region31: #{net_forward.1} parent=1 // pred_check_branch
      %40 = sbr.rel (0) target = $region33
    $region32: #{net_forward.1} parent=1 // pred_region
      _
    $region33: #{net_forward.1} parent=1 // pred_fallthru
      _
    // Predicated region
    $region34: #{net_forward.1} parent=1 // pred_check
      _
    $region35: #{net_forward.1} parent=1 // pred_check_branch
      %42 = sbr.rel (0) target = $region37
    $region36: #{net_forward.1} parent=1 // pred_region
      _
    $region37: #{net_forward.1} parent=1 // pred_fallthru
      _
    // Predicated region
    $region38: #{net_forward.1} parent=1 // pred_check
      _
    $region39: #{net_forward.1} parent=1 // pred_check_branch
      %44 = sbr.rel (0) target = $region41
    $region40: #{net_forward.1} parent=1 // pred_region
      %45 = dma.done [#allocation3], 512
    $region41: #{net_forward.1} parent=1 // pred_fallthru
      _
    %v46 = vld [vmem:[%s0] sm:$0xff]
    %v47 = vld [vmem:[%s0 + $0x8] sm:$0xff]
    %v48 = vld [vmem:[%s1] sm:$0xff]
    %v49 = vld [vmem:[%s2] sm:$0xff]
    %v50 = vld [vmem:[%s2 + $0x8] sm:$0xff]
    %v51 = vld [vmem:[%s2 + $0x10] sm:$0xff]
    %v52 = vld [vmem:[%s2 + $0x18] sm:$0xff]
    %v53 = vld [vmem:[%s3] sm:$0x1]
    %v55 = vlaneseq
    %v56 = vshrl.u32 %v55, 7
    %v57 = vsub.s32 0, %v56
    %v58 = vrot.slane %v53, %v57
    %vm60 = vcmask 64512
    %v62 = vsel %vm60, %v46, 0
    %v65 = vsel %vm60, %v47, 0
    %67 = vmatprep.subr.mxu0 0.0
    %68 = vmatpush1.msra.mxu0 0.0
    %69 = vmatprep.subr.mxu0 0.0
    %70 = vmatpush1.msra.mxu0 0.0
    %71 = vmatprep.subr.mxu0 0.0
    %72 = vmatpush1.msra.mxu0 0.0
    %73 = vmatprep.subr.mxu0 0.0
    %74 = vmatpush1.msra.mxu0 0.0
    %75 = vmatprep.subr.mxu0 0.0
    %76 = vmatpush1.msra.mxu0 0.0
    %77 = vmatprep.subr.mxu0 0.0
    %78 = vmatpush1.msra.mxu0 0.0
    %79 = vmatprep.subr.mxu0 0.0
    %80 = vmatpush1.msra.mxu0 0.0
    %81 = vmatprep.subr.mxu0 0.0
    %82 = vmatpush1.msra.mxu0 0.0
    %83 = vmatprep.subr.mxu0 0.0
    %84 = vmatpush1.msra.mxu0 0.0
    %85 = vmatprep.subr.mxu0 0.0
    %86 = vmatpush1.msra.mxu0 0.0
    %87 = vmatprep.subr.mxu0 0.0
    %88 = vmatpush1.msra.mxu0 0.0
    %89 = vmatprep.subr.mxu0 0.0
    %90 = vmatpush1.msra.mxu0 0.0
    %91 = vmatprep.subr.mxu0 0.0
    %92 = vmatpush1.msra.mxu0 0.0
    %93 = vmatprep.subr.mxu0 0.0
    %94 = vmatpush1.msra.mxu0 0.0
    %95 = vmatprep.subr.mxu0 0.0
    %96 = vmatpush1.msra.mxu0 0.0
    %97 = vmatprep.subr.mxu0 0.0
    %98 = vmatpush1.msra.mxu0 %v48
    %99 = vmatprep.subr.mxu0 0.0
    %100 = vmatpush2.msra.mxu0 0.0
    %101 = vmatprep.subr.mxu0 0.0
    %102 = vmatpush2.msra.mxu0 0.0
    %103 = vmatprep.subr.mxu0 0.0
    %104 = vmatpush2.msra.mxu0 0.0
    %105 = vmatprep.subr.mxu0 0.0
    %106 = vmatpush2.msra.mxu0 0.0
    %107 = vmatprep.subr.mxu0 0.0
    %108 = vmatpush2.msra.mxu0 0.0
    %109 = vmatprep.subr.mxu0 0.0
    %110 = vmatpush2.msra.mxu0 0.0
    %111 = vmatprep.subr.mxu0 0.0
    %112 = vmatpush2.msra.mxu0 0.0
    %113 = vmatprep.subr.mxu0 0.0
    %114 = vmatpush2.msra.mxu0 0.0
    %115 = vmatprep.subr.mxu0 0.0
    %116 = vmatpush2.msra.mxu0 0.0
    %117 = vmatprep.subr.mxu0 0.0
    %118 = vmatpush2.msra.mxu0 0.0
    %119 = vmatprep.subr.mxu0 0.0
    %120 = vmatpush2.msra.mxu0 0.0
    %121 = vmatprep.subr.mxu0 0.0
    %122 = vmatpush2.msra.mxu0 0.0
    %123 = vmatprep.subr.mxu0 0.0
    %124 = vmatpush2.msra.mxu0 0.0
    %125 = vmatprep.subr.mxu0 0.0
    %126 = vmatpush2.msra.mxu0 0.0
    %127 = vmatprep.subr.mxu0 0.0
    %128 = vmatpush2.msra.mxu0 0.0
    %129 = vmatprep.subr.mxu0 0.0
    %130 = vmatpush2.msra.mxu0 0.0
    %131 = vmatprep.mubr.f32.mxu0 0.0
    %132 = vmatmul.mubr.f32.gmra.mxu0 %v62
    %v133 = vpop.f32.mrf.mxu0
    %v134 = vadd.f32 %v58, %v133
    %v135 = vpop.f32.mrf.mxu0
    %136 = vmatprep.mubr.f32.mxu0 0.0
    %137 = vmatmul.mubr.f32.gmra.mxu0 %v65
    %v138 = vpop.f32.mrf.mxu0
    %v139 = vadd.f32 %v58, %v138
    %v140 = vpop.f32.mrf.mxu0
    %141 = vdwg.mxu0
    %vm142 = vcmask 261120
    %v144 = vsel %vm142, 0.0, 0
    %146 = vmatprep.subr.mxu0 0.0
    %147 = vmatpush1.msra.mxu0 0.0
    %148 = vmatprep.subr.mxu0 0.0
    %149 = vmatpush1.msra.mxu0 0.0
    %150 = vmatprep.subr.mxu0 0.0
    %151 = vmatpush1.msra.mxu0 0.0
    %152 = vmatprep.subr.mxu0 0.0
    %153 = vmatpush1.msra.mxu0 0.0
    %154 = vmatprep.subr.mxu0 0.0
    %155 = vmatpush1.msra.mxu0 0.0
    %156 = vmatprep.subr.mxu0 0.0
    %157 = vmatpush1.msra.mxu0 0.0
    %158 = vmatprep.subr.mxu0 0.0
    %159 = vmatpush1.msra.mxu0 0.0
    %160 = vmatprep.subr.mxu0 0.0
    %161 = vmatpush1.msra.mxu0 0.0
    %162 = vmatprep.subr.mxu0 0.0
    %163 = vmatpush1.msra.mxu0 0.0
    %164 = vmatprep.subr.mxu0 0.0
    %165 = vmatpush1.msra.mxu0 0.0
    %166 = vmatprep.subr.mxu0 0.0
    %167 = vmatpush1.msra.mxu0 0.0
    %168 = vmatprep.subr.mxu0 0.0
    %169 = vmatpush1.msra.mxu0 0.0
    %170 = vmatprep.subr.mxu0 0.0
    %171 = vmatpush1.msra.mxu0 %v52
    %172 = vmatprep.subr.mxu0 0.0
    %173 = vmatpush1.msra.mxu0 %v51
    %174 = vmatprep.subr.mxu0 0.0
    %175 = vmatpush1.msra.mxu0 %v50
    %176 = vmatprep.subr.mxu0 0.0
    %177 = vmatpush1.msra.mxu0 %v49
    %178 = vmatprep.subr.mxu0 0.0
    %179 = vmatpush2.msra.mxu0 0.0
    %180 = vmatprep.subr.mxu0 0.0
    %181 = vmatpush2.msra.mxu0 0.0
    %182 = vmatprep.subr.mxu0 0.0
    %183 = vmatpush2.msra.mxu0 0.0
    %184 = vmatprep.subr.mxu0 0.0
    %185 = vmatpush2.msra.mxu0 0.0
    %186 = vmatprep.subr.mxu0 0.0
    %187 = vmatpush2.msra.mxu0 0.0
    %188 = vmatprep.subr.mxu0 0.0
    %189 = vmatpush2.msra.mxu0 0.0
    %190 = vmatprep.subr.mxu0 0.0
    %191 = vmatpush2.msra.mxu0 0.0
    %192 = vmatprep.subr.mxu0 0.0
    %193 = vmatpush2.msra.mxu0 0.0
    %194 = vmatprep.subr.mxu0 0.0
    %195 = vmatpush2.msra.mxu0 0.0
    %196 = vmatprep.subr.mxu0 0.0
    %197 = vmatpush2.msra.mxu0 0.0
    %198 = vmatprep.subr.mxu0 0.0
    %199 = vmatpush2.msra.mxu0 0.0
    %200 = vmatprep.subr.mxu0 0.0
    %201 = vmatpush2.msra.mxu0 0.0
    %202 = vmatprep.subr.mxu0 0.0
    %203 = vmatpush2.msra.mxu0 0.0
    %204 = vmatprep.subr.mxu0 0.0
    %205 = vmatpush2.msra.mxu0 0.0
    %206 = vmatprep.subr.mxu0 0.0
    %207 = vmatpush2.msra.mxu0 0.0
    %208 = vmatprep.subr.mxu0 0.0
    %209 = vmatpush2.msra.mxu0 0.0
    %210 = vmatprep.mubr.f32.mxu0 0.0
    %211 = vmatmul.mubr.f32.gmra.mxu0 %v144
    %v212 = vpop.f32.mrf.mxu0
    %v213 = vadd.f32 0.0, %v212
    %v214 = vpop.f32.mrf.mxu0
    %215 = vdwg.mxu0
    %v216 = vadd.f32 %v134, %v213
    %v217 = vxor.u32 %v216, 2147483648
    %v218 = vmul.f32 %v217, 1.442695
    %v219 = vpow.pop %v218
    %v220 = vadd.f32 %v219, 1.0
    %v221 = vrcp.pop %v220
    %v222 = vmul.f32 1.0, %v221
    %v223 = vtanh.pop %v216
    %v224 = vmul.f32 %v222, 0.0
    %226 = vrot.lane.b32.xlu0 %v223, 64
    %v227 = vpop.permute.xlu0 %226
    %v229 = vmul.f32 %v222, %v227
    %231 = vrot.lane.b32.xlu0 %v229, 32
    %v232 = vpop.permute.xlu0 %231
    %v234 = vadd.f32 %v224, %v232
    %v235 = vtanh.pop %v234
    %237 = vrot.lane.b32.xlu0 %v235, 64
    %v238 = vpop.permute.xlu0 %237
    %v240 = vmul.f32 %v222, %v238
    %242 = vrot.lane.b32.xlu0 %v240, 32
    %v243 = vpop.permute.xlu0 %242
    %v244 = vsel %vm142, %v243, 0
    %246 = vmatprep.subr.mxu0 0.0
    %247 = vmatpush1.msra.mxu0 0.0
    %248 = vmatprep.subr.mxu0 0.0
    %249 = vmatpush1.msra.mxu0 0.0
    %250 = vmatprep.subr.mxu0 0.0
    %251 = vmatpush1.msra.mxu0 0.0
    %252 = vmatprep.subr.mxu0 0.0
    %253 = vmatpush1.msra.mxu0 0.0
    %254 = vmatprep.subr.mxu0 0.0
    %255 = vmatpush1.msra.mxu0 0.0
    %256 = vmatprep.subr.mxu0 0.0
    %257 = vmatpush1.msra.mxu0 0.0
    %258 = vmatprep.subr.mxu0 0.0
    %259 = vmatpush1.msra.mxu0 0.0
    %260 = vmatprep.subr.mxu0 0.0
    %261 = vmatpush1.msra.mxu0 0.0
    %262 = vmatprep.subr.mxu0 0.0
    %263 = vmatpush1.msra.mxu0 0.0
    %264 = vmatprep.subr.mxu0 0.0
    %265 = vmatpush1.msra.mxu0 0.0
    %266 = vmatprep.subr.mxu0 0.0
    %267 = vmatpush1.msra.mxu0 0.0
    %268 = vmatprep.subr.mxu0 0.0
    %269 = vmatpush1.msra.mxu0 0.0
    %270 = vmatprep.subr.mxu0 0.0
    %271 = vmatpush1.msra.mxu0 %v52
    %272 = vmatprep.subr.mxu0 0.0
    %273 = vmatpush1.msra.mxu0 %v51
    %274 = vmatprep.subr.mxu0 0.0
    %275 = vmatpush1.msra.mxu0 %v50
    %276 = vmatprep.subr.mxu0 0.0
    %277 = vmatpush1.msra.mxu0 %v49
    %278 = vmatprep.subr.mxu0 0.0
    %279 = vmatpush2.msra.mxu0 0.0
    %280 = vmatprep.subr.mxu0 0.0
    %281 = vmatpush2.msra.mxu0 0.0
    %282 = vmatprep.subr.mxu0 0.0
    %283 = vmatpush2.msra.mxu0 0.0
    %284 = vmatprep.subr.mxu0 0.0
    %285 = vmatpush2.msra.mxu0 0.0
    %286 = vmatprep.subr.mxu0 0.0
    %287 = vmatpush2.msra.mxu0 0.0
    %288 = vmatprep.subr.mxu0 0.0
    %289 = vmatpush2.msra.mxu0 0.0
    %290 = vmatprep.subr.mxu0 0.0
    %291 = vmatpush2.msra.mxu0 0.0
    %292 = vmatprep.subr.mxu0 0.0
    %293 = vmatpush2.msra.mxu0 0.0
    %294 = vmatprep.subr.mxu0 0.0
    %295 = vmatpush2.msra.mxu0 0.0
    %296 = vmatprep.subr.mxu0 0.0
    %297 = vmatpush2.msra.mxu0 0.0
    %298 = vmatprep.subr.mxu0 0.0
    %299 = vmatpush2.msra.mxu0 0.0
    %300 = vmatprep.subr.mxu0 0.0
    %301 = vmatpush2.msra.mxu0 0.0
    %302 = vmatprep.subr.mxu0 0.0
    %303 = vmatpush2.msra.mxu0 0.0
    %304 = vmatprep.subr.mxu0 0.0
    %305 = vmatpush2.msra.mxu0 0.0
    %306 = vmatprep.subr.mxu0 0.0
    %307 = vmatpush2.msra.mxu0 0.0
    %308 = vmatprep.subr.mxu0 0.0
    %309 = vmatpush2.msra.mxu0 0.0
    %310 = vmatprep.mubr.f32.mxu0 0.0
    %311 = vmatmul.mubr.f32.gmra.mxu0 %v244
    %v312 = vpop.f32.mrf.mxu0
    %v313 = vadd.f32 0.0, %v312
    %v314 = vpop.f32.mrf.mxu0
    %315 = vdwg.mxu0
    %v317 = vrot.slane %v313, 6
    %v319 = vadd.f32 %v134, %v317
    %v320 = vxor.u32 %v319, 2147483648
    %v321 = vmul.f32 %v320, 1.442695
    %v322 = vpow.pop %v321
    %v323 = vadd.f32 %v322, 1.0
    %v324 = vrcp.pop %v323
    %v325 = vmul.f32 1.0, %v324
    %v326 = vtanh.pop %v319
    %v328 = vrot.slane %v234, 6
    %v330 = vmul.f32 %v325, %v328
    %332 = vrot.lane.b32.xlu0 %v326, 64
    %v333 = vpop.permute.xlu0 %332
    %v335 = vmul.f32 %v325, %v333
    %337 = vrot.lane.b32.xlu0 %v335, 32
    %v338 = vpop.permute.xlu0 %337
    %v340 = vadd.f32 %v330, %v338
    %v341 = vtanh.pop %v340
    %343 = vrot.lane.b32.xlu0 %v341, 64
    %v344 = vpop.permute.xlu0 %343
    %v346 = vmul.f32 %v325, %v344
    %v348 = vrot.slane %v346, 2
    %349 = vrot.lane.b32.xlu0 %v348, 32
    %v350 = vpop.permute.xlu0 %349
    %v351 = vsel %vm142, %v350, 0
    %353 = vmatprep.subr.mxu0 0.0
    %354 = vmatpush1.msra.mxu0 0.0
    %355 = vmatprep.subr.mxu0 0.0
    %356 = vmatpush1.msra.mxu0 0.0
    %357 = vmatprep.subr.mxu0 0.0
    %358 = vmatpush1.msra.mxu0 0.0
    %359 = vmatprep.subr.mxu0 0.0
    %360 = vmatpush1.msra.mxu0 0.0
    %361 = vmatprep.subr.mxu0 0.0
    %362 = vmatpush1.msra.mxu0 0.0
    %363 = vmatprep.subr.mxu0 0.0
    %364 = vmatpush1.msra.mxu0 0.0
    %365 = vmatprep.subr.mxu0 0.0
    %366 = vmatpush1.msra.mxu0 0.0
    %367 = vmatprep.subr.mxu0 0.0
    %368 = vmatpush1.msra.mxu0 0.0
    %369 = vmatprep.subr.mxu0 0.0
    %370 = vmatpush1.msra.mxu0 0.0
    %371 = vmatprep.subr.mxu0 0.0
    %372 = vmatpush1.msra.mxu0 0.0
    %373 = vmatprep.subr.mxu0 0.0
    %374 = vmatpush1.msra.mxu0 0.0
    %375 = vmatprep.subr.mxu0 0.0
    %376 = vmatpush1.msra.mxu0 0.0
    %377 = vmatprep.subr.mxu0 0.0
    %378 = vmatpush1.msra.mxu0 %v52
    %379 = vmatprep.subr.mxu0 0.0
    %380 = vmatpush1.msra.mxu0 %v51
    %381 = vmatprep.subr.mxu0 0.0
    %382 = vmatpush1.msra.mxu0 %v50
    %383 = vmatprep.subr.mxu0 0.0
    %384 = vmatpush1.msra.mxu0 %v49
    %385 = vmatprep.subr.mxu0 0.0
    %386 = vmatpush2.msra.mxu0 0.0
    %387 = vmatprep.subr.mxu0 0.0
    %388 = vmatpush2.msra.mxu0 0.0
    %389 = vmatprep.subr.mxu0 0.0
    %390 = vmatpush2.msra.mxu0 0.0
    %391 = vmatprep.subr.mxu0 0.0
    %392 = vmatpush2.msra.mxu0 0.0
    %393 = vmatprep.subr.mxu0 0.0
    %394 = vmatpush2.msra.mxu0 0.0
    %395 = vmatprep.subr.mxu0 0.0
    %396 = vmatpush2.msra.mxu0 0.0
    %397 = vmatprep.subr.mxu0 0.0
    %398 = vmatpush2.msra.mxu0 0.0
    %399 = vmatprep.subr.mxu0 0.0
    %400 = vmatpush2.msra.mxu0 0.0
    %401 = vmatprep.subr.mxu0 0.0
    %402 = vmatpush2.msra.mxu0 0.0
    %403 = vmatprep.subr.mxu0 0.0
    %404 = vmatpush2.msra.mxu0 0.0
    %405 = vmatprep.subr.mxu0 0.0
    %406 = vmatpush2.msra.mxu0 0.0
    %407 = vmatprep.subr.mxu0 0.0
    %408 = vmatpush2.msra.mxu0 0.0
    %409 = vmatprep.subr.mxu0 0.0
    %410 = vmatpush2.msra.mxu0 0.0
    %411 = vmatprep.subr.mxu0 0.0
    %412 = vmatpush2.msra.mxu0 0.0
    %413 = vmatprep.subr.mxu0 0.0
    %414 = vmatpush2.msra.mxu0 0.0
    %415 = vmatprep.subr.mxu0 0.0
    %416 = vmatpush2.msra.mxu0 0.0
    %417 = vmatprep.mubr.f32.mxu0 0.0
    %418 = vmatmul.mubr.f32.gmra.mxu0 %v351
    %v419 = vpop.f32.mrf.mxu0
    %v420 = vadd.f32 0.0, %v419
    %v421 = vpop.f32.mrf.mxu0
    %422 = vdwg.mxu0
    %v424 = vrot.slane %v420, 4
    %v426 = vadd.f32 %v134, %v424
    %v427 = vxor.u32 %v426, 2147483648
    %v428 = vmul.f32 %v427, 1.442695
    %v429 = vpow.pop %v428
    %v430 = vadd.f32 %v429, 1.0
    %v431 = vrcp.pop %v430
    %v432 = vmul.f32 1.0, %v431
    %v433 = vtanh.pop %v426
    %v435 = vrot.slane %v340, 6
    %v437 = vmul.f32 %v432, %v435
    %439 = vrot.lane.b32.xlu0 %v433, 64
    %v440 = vpop.permute.xlu0 %439
    %v442 = vmul.f32 %v432, %v440
    %444 = vrot.lane.b32.xlu0 %v442, 32
    %v445 = vpop.permute.xlu0 %444
    %v447 = vadd.f32 %v437, %v445
    %v448 = vtanh.pop %v447
    %450 = vrot.lane.b32.xlu0 %v448, 64
    %v451 = vpop.permute.xlu0 %450
    %v453 = vmul.f32 %v432, %v451
    %v455 = vrot.slane %v453, 4
    %456 = vrot.lane.b32.xlu0 %v455, 32
    %v457 = vpop.permute.xlu0 %456
    %v458 = vsel %vm142, %v457, 0
    %460 = vmatprep.subr.mxu0 0.0
    %461 = vmatpush1.msra.mxu0 0.0
    %462 = vmatprep.subr.mxu0 0.0
    %463 = vmatpush1.msra.mxu0 0.0
    %464 = vmatprep.subr.mxu0 0.0
    %465 = vmatpush1.msra.mxu0 0.0
    %466 = vmatprep.subr.mxu0 0.0
    %467 = vmatpush1.msra.mxu0 0.0
    %468 = vmatprep.subr.mxu0 0.0
    %469 = vmatpush1.msra.mxu0 0.0
    %470 = vmatprep.subr.mxu0 0.0
    %471 = vmatpush1.msra.mxu0 0.0
    %472 = vmatprep.subr.mxu0 0.0
    %473 = vmatpush1.msra.mxu0 0.0
    %474 = vmatprep.subr.mxu0 0.0
    %475 = vmatpush1.msra.mxu0 0.0
    %476 = vmatprep.subr.mxu0 0.0
    %477 = vmatpush1.msra.mxu0 0.0
    %478 = vmatprep.subr.mxu0 0.0
    %479 = vmatpush1.msra.mxu0 0.0
    %480 = vmatprep.subr.mxu0 0.0
    %481 = vmatpush1.msra.mxu0 0.0
    %482 = vmatprep.subr.mxu0 0.0
    %483 = vmatpush1.msra.mxu0 0.0
    %484 = vmatprep.subr.mxu0 0.0
    %485 = vmatpush1.msra.mxu0 %v52
    %486 = vmatprep.subr.mxu0 0.0
    %487 = vmatpush1.msra.mxu0 %v51
    %488 = vmatprep.subr.mxu0 0.0
    %489 = vmatpush1.msra.mxu0 %v50
    %490 = vmatprep.subr.mxu0 0.0
    %491 = vmatpush1.msra.mxu0 %v49
    %492 = vmatprep.subr.mxu0 0.0
    %493 = vmatpush2.msra.mxu0 0.0
    %494 = vmatprep.subr.mxu0 0.0
    %495 = vmatpush2.msra.mxu0 0.0
    %496 = vmatprep.subr.mxu0 0.0
    %497 = vmatpush2.msra.mxu0 0.0
    %498 = vmatprep.subr.mxu0 0.0
    %499 = vmatpush2.msra.mxu0 0.0
    %500 = vmatprep.subr.mxu0 0.0
    %501 = vmatpush2.msra.mxu0 0.0
    %502 = vmatprep.subr.mxu0 0.0
    %503 = vmatpush2.msra.mxu0 0.0
    %504 = vmatprep.subr.mxu0 0.0
    %505 = vmatpush2.msra.mxu0 0.0
    %506 = vmatprep.subr.mxu0 0.0
    %507 = vmatpush2.msra.mxu0 0.0
    %508 = vmatprep.subr.mxu0 0.0
    %509 = vmatpush2.msra.mxu0 0.0
    %510 = vmatprep.subr.mxu0 0.0
    %511 = vmatpush2.msra.mxu0 0.0
    %512 = vmatprep.subr.mxu0 0.0
    %513 = vmatpush2.msra.mxu0 0.0
    %514 = vmatprep.subr.mxu0 0.0
    %515 = vmatpush2.msra.mxu0 0.0
    %516 = vmatprep.subr.mxu0 0.0
    %517 = vmatpush2.msra.mxu0 0.0
    %518 = vmatprep.subr.mxu0 0.0
    %519 = vmatpush2.msra.mxu0 0.0
    %520 = vmatprep.subr.mxu0 0.0
    %521 = vmatpush2.msra.mxu0 0.0
    %522 = vmatprep.subr.mxu0 0.0
    %523 = vmatpush2.msra.mxu0 0.0
    %524 = vmatprep.mubr.f32.mxu0 0.0
    %525 = vmatmul.mubr.f32.gmra.mxu0 %v458
    %v526 = vpop.f32.mrf.mxu0
    %v527 = vadd.f32 0.0, %v526
    %v528 = vpop.f32.mrf.mxu0
    %529 = vdwg.mxu0
    %v531 = vrot.slane %v527, 2
    %v533 = vadd.f32 %v134, %v531
    %v534 = vxor.u32 %v533, 2147483648
    %v535 = vmul.f32 %v534, 1.442695
    %v536 = vpow.pop %v535
    %v537 = vadd.f32 %v536, 1.0
    %v538 = vrcp.pop %v537
    %v539 = vmul.f32 1.0, %v538
    %v540 = vtanh.pop %v533
    %v542 = vrot.slane %v447, 6
    %v544 = vmul.f32 %v539, %v542
    %546 = vrot.lane.b32.xlu0 %v540, 64
    %v547 = vpop.permute.xlu0 %546
    %v549 = vmul.f32 %v539, %v547
    %551 = vrot.lane.b32.xlu0 %v549, 32
    %v552 = vpop.permute.xlu0 %551
    %v554 = vadd.f32 %v544, %v552
    %v555 = vtanh.pop %v554
    %557 = vrot.lane.b32.xlu0 %v555, 64
    %v558 = vpop.permute.xlu0 %557
    %v560 = vmul.f32 %v539, %v558
    %v562 = vrot.slane %v560, 6
    %563 = vrot.lane.b32.xlu0 %v562, 32
    %v564 = vpop.permute.xlu0 %563
    %v565 = vsel %vm142, %v564, 0
    %567 = vmatprep.subr.mxu0 0.0
    %568 = vmatpush1.msra.mxu0 0.0
    %569 = vmatprep.subr.mxu0 0.0
    %570 = vmatpush1.msra.mxu0 0.0
    %571 = vmatprep.subr.mxu0 0.0
    %572 = vmatpush1.msra.mxu0 0.0
    %573 = vmatprep.subr.mxu0 0.0
    %574 = vmatpush1.msra.mxu0 0.0
    %575 = vmatprep.subr.mxu0 0.0
    %576 = vmatpush1.msra.mxu0 0.0
    %577 = vmatprep.subr.mxu0 0.0
    %578 = vmatpush1.msra.mxu0 0.0
    %579 = vmatprep.subr.mxu0 0.0
    %580 = vmatpush1.msra.mxu0 0.0
    %581 = vmatprep.subr.mxu0 0.0
    %582 = vmatpush1.msra.mxu0 0.0
    %583 = vmatprep.subr.mxu0 0.0
    %584 = vmatpush1.msra.mxu0 0.0
    %585 = vmatprep.subr.mxu0 0.0
    %586 = vmatpush1.msra.mxu0 0.0
    %587 = vmatprep.subr.mxu0 0.0
    %588 = vmatpush1.msra.mxu0 0.0
    %589 = vmatprep.subr.mxu0 0.0
    %590 = vmatpush1.msra.mxu0 0.0
    %591 = vmatprep.subr.mxu0 0.0
    %592 = vmatpush1.msra.mxu0 %v52
    %593 = vmatprep.subr.mxu0 0.0
    %594 = vmatpush1.msra.mxu0 %v51
    %595 = vmatprep.subr.mxu0 0.0
    %596 = vmatpush1.msra.mxu0 %v50
    %597 = vmatprep.subr.mxu0 0.0
    %598 = vmatpush1.msra.mxu0 %v49
    %599 = vmatprep.subr.mxu0 0.0
    %600 = vmatpush2.msra.mxu0 0.0
    %601 = vmatprep.subr.mxu0 0.0
    %602 = vmatpush2.msra.mxu0 0.0
    %603 = vmatprep.subr.mxu0 0.0
    %604 = vmatpush2.msra.mxu0 0.0
    %605 = vmatprep.subr.mxu0 0.0
    %606 = vmatpush2.msra.mxu0 0.0
    %607 = vmatprep.subr.mxu0 0.0
    %608 = vmatpush2.msra.mxu0 0.0
    %609 = vmatprep.subr.mxu0 0.0
    %610 = vmatpush2.msra.mxu0 0.0
    %611 = vmatprep.subr.mxu0 0.0
    %612 = vmatpush2.msra.mxu0 0.0
    %613 = vmatprep.subr.mxu0 0.0
    %614 = vmatpush2.msra.mxu0 0.0
    %615 = vmatprep.subr.mxu0 0.0
    %616 = vmatpush2.msra.mxu0 0.0
    %617 = vmatprep.subr.mxu0 0.0
    %618 = vmatpush2.msra.mxu0 0.0
    %619 = vmatprep.subr.mxu0 0.0
    %620 = vmatpush2.msra.mxu0 0.0
    %621 = vmatprep.subr.mxu0 0.0
    %622 = vmatpush2.msra.mxu0 0.0
    %623 = vmatprep.subr.mxu0 0.0
    %624 = vmatpush2.msra.mxu0 0.0
    %625 = vmatprep.subr.mxu0 0.0
    %626 = vmatpush2.msra.mxu0 0.0
    %627 = vmatprep.subr.mxu0 0.0
    %628 = vmatpush2.msra.mxu0 0.0
    %629 = vmatprep.subr.mxu0 0.0
    %630 = vmatpush2.msra.mxu0 0.0
    %631 = vmatprep.mubr.f32.mxu0 0.0
    %632 = vmatmul.mubr.f32.gmra.mxu0 %v565
    %v633 = vpop.f32.mrf.mxu0
    %v634 = vadd.f32 0.0, %v633
    %v635 = vpop.f32.mrf.mxu0
    %636 = vdwg.mxu0
    %v637 = vadd.f32 %v139, %v634
    %v638 = vxor.u32 %v637, 2147483648
    %v639 = vmul.f32 %v638, 1.442695
    %v640 = vpow.pop %v639
    %v641 = vadd.f32 %v640, 1.0
    %v642 = vrcp.pop %v641
    %v643 = vmul.f32 1.0, %v642
    %v644 = vtanh.pop %v637
    %v646 = vrot.slane %v554, 6
    %v648 = vmul.f32 %v643, %v646
    %650 = vrot.lane.b32.xlu0 %v644, 64
    %v651 = vpop.permute.xlu0 %650
    %v653 = vmul.f32 %v643, %v651
    %655 = vrot.lane.b32.xlu0 %v653, 32
    %v656 = vpop.permute.xlu0 %655
    %v658 = vadd.f32 %v648, %v656
    %v659 = vtanh.pop %v658
    %661 = vrot.lane.b32.xlu0 %v659, 64
    %v662 = vpop.permute.xlu0 %661
    %v664 = vmul.f32 %v643, %v662
    %666 = vrot.lane.b32.xlu0 %v664, 32
    %v667 = vpop.permute.xlu0 %666
    %v668 = vsel %vm142, %v667, 0
    %670 = vmatprep.subr.mxu0 0.0
    %671 = vmatpush1.msra.mxu0 0.0
    %672 = vmatprep.subr.mxu0 0.0
    %673 = vmatpush1.msra.mxu0 0.0
    %674 = vmatprep.subr.mxu0 0.0
    %675 = vmatpush1.msra.mxu0 0.0
    %676 = vmatprep.subr.mxu0 0.0
    %677 = vmatpush1.msra.mxu0 0.0
    %678 = vmatprep.subr.mxu0 0.0
    %679 = vmatpush1.msra.mxu0 0.0
    %680 = vmatprep.subr.mxu0 0.0
    %681 = vmatpush1.msra.mxu0 0.0
    %682 = vmatprep.subr.mxu0 0.0
    %683 = vmatpush1.msra.mxu0 0.0
    %684 = vmatprep.subr.mxu0 0.0
    %685 = vmatpush1.msra.mxu0 0.0
    %686 = vmatprep.subr.mxu0 0.0
    %687 = vmatpush1.msra.mxu0 0.0
    %688 = vmatprep.subr.mxu0 0.0
    %689 = vmatpush1.msra.mxu0 0.0
    %690 = vmatprep.subr.mxu0 0.0
    %691 = vmatpush1.msra.mxu0 0.0
    %692 = vmatprep.subr.mxu0 0.0
    %693 = vmatpush1.msra.mxu0 0.0
    %694 = vmatprep.subr.mxu0 0.0
    %695 = vmatpush1.msra.mxu0 %v52
    %696 = vmatprep.subr.mxu0 0.0
    %697 = vmatpush1.msra.mxu0 %v51
    %698 = vmatprep.subr.mxu0 0.0
    %699 = vmatpush1.msra.mxu0 %v50
    %700 = vmatprep.subr.mxu0 0.0
    %701 = vmatpush1.msra.mxu0 %v49
    %702 = vmatprep.subr.mxu0 0.0
    %703 = vmatpush2.msra.mxu0 0.0
    %704 = vmatprep.subr.mxu0 0.0
    %705 = vmatpush2.msra.mxu0 0.0
    %706 = vmatprep.subr.mxu0 0.0
    %707 = vmatpush2.msra.mxu0 0.0
    %708 = vmatprep.subr.mxu0 0.0
    %709 = vmatpush2.msra.mxu0 0.0
    %710 = vmatprep.subr.mxu0 0.0
    %711 = vmatpush2.msra.mxu0 0.0
    %712 = vmatprep.subr.mxu0 0.0
    %713 = vmatpush2.msra.mxu0 0.0
    %714 = vmatprep.subr.mxu0 0.0
    %715 = vmatpush2.msra.mxu0 0.0
    %716 = vmatprep.subr.mxu0 0.0
    %717 = vmatpush2.msra.mxu0 0.0
    %718 = vmatprep.subr.mxu0 0.0
    %719 = vmatpush2.msra.mxu0 0.0
    %720 = vmatprep.subr.mxu0 0.0
    %721 = vmatpush2.msra.mxu0 0.0
    %722 = vmatprep.subr.mxu0 0.0
    %723 = vmatpush2.msra.mxu0 0.0
    %724 = vmatprep.subr.mxu0 0.0
    %725 = vmatpush2.msra.mxu0 0.0
    %726 = vmatprep.subr.mxu0 0.0
    %727 = vmatpush2.msra.mxu0 0.0
    %728 = vmatprep.subr.mxu0 0.0
    %729 = vmatpush2.msra.mxu0 0.0
    %730 = vmatprep.subr.mxu0 0.0
    %731 = vmatpush2.msra.mxu0 0.0
    %732 = vmatprep.subr.mxu0 0.0
    %733 = vmatpush2.msra.mxu0 0.0
    %734 = vmatprep.mubr.f32.mxu0 0.0
    %735 = vmatmul.mubr.f32.gmra.mxu0 %v668
    %v736 = vpop.f32.mrf.mxu0
    %v737 = vadd.f32 0.0, %v736
    %v738 = vpop.f32.mrf.mxu0
    %739 = vdwg.mxu0
    %v741 = vrot.slane %v737, 6
    %v743 = vadd.f32 %v139, %v741
    %v744 = vxor.u32 %v743, 2147483648
    %v745 = vmul.f32 %v744, 1.442695
    %v746 = vpow.pop %v745
    %v747 = vadd.f32 %v746, 1.0
    %v748 = vrcp.pop %v747
    %v749 = vmul.f32 1.0, %v748
    %v750 = vtanh.pop %v743
    %v752 = vrot.slane %v658, 6
    %v754 = vmul.f32 %v749, %v752
    %756 = vrot.lane.b32.xlu0 %v750, 64
    %v757 = vpop.permute.xlu0 %756
    %v759 = vmul.f32 %v749, %v757
    %761 = vrot.lane.b32.xlu0 %v759, 32
    %v762 = vpop.permute.xlu0 %761
    %v764 = vadd.f32 %v754, %v762
    %v765 = vtanh.pop %v764
    %767 = vrot.lane.b32.xlu0 %v765, 64
    %v768 = vpop.permute.xlu0 %767
    %v770 = vmul.f32 %v749, %v768
    %v772 = vrot.slane %v770, 2
    %773 = vrot.lane.b32.xlu0 %v772, 32
    %v774 = vpop.permute.xlu0 %773
    %v775 = vsel %vm142, %v774, 0
    %777 = vmatprep.subr.mxu0 0.0
    %778 = vmatpush1.msra.mxu0 0.0
    %779 = vmatprep.subr.mxu0 0.0
    %780 = vmatpush1.msra.mxu0 0.0
    %781 = vmatprep.subr.mxu0 0.0
    %782 = vmatpush1.msra.mxu0 0.0
    %783 = vmatprep.subr.mxu0 0.0
    %784 = vmatpush1.msra.mxu0 0.0
    %785 = vmatprep.subr.mxu0 0.0
    %786 = vmatpush1.msra.mxu0 0.0
    %787 = vmatprep.subr.mxu0 0.0
    %788 = vmatpush1.msra.mxu0 0.0
    %789 = vmatprep.subr.mxu0 0.0
    %790 = vmatpush1.msra.mxu0 0.0
    %791 = vmatprep.subr.mxu0 0.0
    %792 = vmatpush1.msra.mxu0 0.0
    %793 = vmatprep.subr.mxu0 0.0
    %794 = vmatpush1.msra.mxu0 0.0
    %795 = vmatprep.subr.mxu0 0.0
    %796 = vmatpush1.msra.mxu0 0.0
    %797 = vmatprep.subr.mxu0 0.0
    %798 = vmatpush1.msra.mxu0 0.0
    %799 = vmatprep.subr.mxu0 0.0
    %800 = vmatpush1.msra.mxu0 0.0
    %801 = vmatprep.subr.mxu0 0.0
    %802 = vmatpush1.msra.mxu0 %v52
    %803 = vmatprep.subr.mxu0 0.0
    %804 = vmatpush1.msra.mxu0 %v51
    %805 = vmatprep.subr.mxu0 0.0
    %806 = vmatpush1.msra.mxu0 %v50
    %807 = vmatprep.subr.mxu0 0.0
    %808 = vmatpush1.msra.mxu0 %v49
    %809 = vmatprep.subr.mxu0 0.0
    %810 = vmatpush2.msra.mxu0 0.0
    %811 = vmatprep.subr.mxu0 0.0
    %812 = vmatpush2.msra.mxu0 0.0
    %813 = vmatprep.subr.mxu0 0.0
    %814 = vmatpush2.msra.mxu0 0.0
    %815 = vmatprep.subr.mxu0 0.0
    %816 = vmatpush2.msra.mxu0 0.0
    %817 = vmatprep.subr.mxu0 0.0
    %818 = vmatpush2.msra.mxu0 0.0
    %819 = vmatprep.subr.mxu0 0.0
    %820 = vmatpush2.msra.mxu0 0.0
    %821 = vmatprep.subr.mxu0 0.0
    %822 = vmatpush2.msra.mxu0 0.0
    %823 = vmatprep.subr.mxu0 0.0
    %824 = vmatpush2.msra.mxu0 0.0
    %825 = vmatprep.subr.mxu0 0.0
    %826 = vmatpush2.msra.mxu0 0.0
    %827 = vmatprep.subr.mxu0 0.0
    %828 = vmatpush2.msra.mxu0 0.0
    %829 = vmatprep.subr.mxu0 0.0
    %830 = vmatpush2.msra.mxu0 0.0
    %831 = vmatprep.subr.mxu0 0.0
    %832 = vmatpush2.msra.mxu0 0.0
    %833 = vmatprep.subr.mxu0 0.0
    %834 = vmatpush2.msra.mxu0 0.0
    %835 = vmatprep.subr.mxu0 0.0
    %836 = vmatpush2.msra.mxu0 0.0
    %837 = vmatprep.subr.mxu0 0.0
    %838 = vmatpush2.msra.mxu0 0.0
    %839 = vmatprep.subr.mxu0 0.0
    %840 = vmatpush2.msra.mxu0 0.0
    %841 = vmatprep.mubr.f32.mxu0 0.0
    %842 = vmatmul.mubr.f32.gmra.mxu0 %v775
    %v843 = vpop.f32.mrf.mxu0
    %v844 = vadd.f32 0.0, %v843
    %v845 = vpop.f32.mrf.mxu0
    %846 = vdwg.mxu0
    %v848 = vrot.slane %v844, 4
    %v850 = vadd.f32 %v139, %v848
    %v851 = vxor.u32 %v850, 2147483648
    %v852 = vmul.f32 %v851, 1.442695
    %v853 = vpow.pop %v852
    %v854 = vadd.f32 %v853, 1.0
    %v855 = vrcp.pop %v854
    %v856 = vmul.f32 1.0, %v855
    %v857 = vtanh.pop %v850
    %v859 = vrot.slane %v764, 6
    %v861 = vmul.f32 %v856, %v859
    %863 = vrot.lane.b32.xlu0 %v857, 64
    %v864 = vpop.permute.xlu0 %863
    %v866 = vmul.f32 %v856, %v864
    %868 = vrot.lane.b32.xlu0 %v866, 32
    %v869 = vpop.permute.xlu0 %868
    %v871 = vadd.f32 %v861, %v869
    %v872 = vtanh.pop %v871
    %874 = vrot.lane.b32.xlu0 %v872, 64
    %v875 = vpop.permute.xlu0 %874
    %v877 = vmul.f32 %v856, %v875
    %v879 = vrot.slane %v877, 4
    %880 = vrot.lane.b32.xlu0 %v879, 32
    %v881 = vpop.permute.xlu0 %880
    %v882 = vsel %vm142, %v881, 0
    %884 = vmatprep.subr.mxu0 0.0
    %885 = vmatpush1.msra.mxu0 0.0
    %886 = vmatprep.subr.mxu0 0.0
    %887 = vmatpush1.msra.mxu0 0.0
    %888 = vmatprep.subr.mxu0 0.0
    %889 = vmatpush1.msra.mxu0 0.0
    %890 = vmatprep.subr.mxu0 0.0
    %891 = vmatpush1.msra.mxu0 0.0
    %892 = vmatprep.subr.mxu0 0.0
    %893 = vmatpush1.msra.mxu0 0.0
    %894 = vmatprep.subr.mxu0 0.0
    %895 = vmatpush1.msra.mxu0 0.0
    %896 = vmatprep.subr.mxu0 0.0
    %897 = vmatpush1.msra.mxu0 0.0
    %898 = vmatprep.subr.mxu0 0.0
    %899 = vmatpush1.msra.mxu0 0.0
    %900 = vmatprep.subr.mxu0 0.0
    %901 = vmatpush1.msra.mxu0 0.0
    %902 = vmatprep.subr.mxu0 0.0
    %903 = vmatpush1.msra.mxu0 0.0
    %904 = vmatprep.subr.mxu0 0.0
    %905 = vmatpush1.msra.mxu0 0.0
    %906 = vmatprep.subr.mxu0 0.0
    %907 = vmatpush1.msra.mxu0 0.0
    %908 = vmatprep.subr.mxu0 0.0
    %909 = vmatpush1.msra.mxu0 %v52
    %910 = vmatprep.subr.mxu0 0.0
    %911 = vmatpush1.msra.mxu0 %v51
    %912 = vmatprep.subr.mxu0 0.0
    %913 = vmatpush1.msra.mxu0 %v50
    %914 = vmatprep.subr.mxu0 0.0
    %915 = vmatpush1.msra.mxu0 %v49
    %916 = vmatprep.subr.mxu0 0.0
    %917 = vmatpush2.msra.mxu0 0.0
    %918 = vmatprep.subr.mxu0 0.0
    %919 = vmatpush2.msra.mxu0 0.0
    %920 = vmatprep.subr.mxu0 0.0
    %921 = vmatpush2.msra.mxu0 0.0
    %922 = vmatprep.subr.mxu0 0.0
    %923 = vmatpush2.msra.mxu0 0.0
    %924 = vmatprep.subr.mxu0 0.0
    %925 = vmatpush2.msra.mxu0 0.0
    %926 = vmatprep.subr.mxu0 0.0
    %927 = vmatpush2.msra.mxu0 0.0
    %928 = vmatprep.subr.mxu0 0.0
    %929 = vmatpush2.msra.mxu0 0.0
    %930 = vmatprep.subr.mxu0 0.0
    %931 = vmatpush2.msra.mxu0 0.0
    %932 = vmatprep.subr.mxu0 0.0
    %933 = vmatpush2.msra.mxu0 0.0
    %934 = vmatprep.subr.mxu0 0.0
    %935 = vmatpush2.msra.mxu0 0.0
    %936 = vmatprep.subr.mxu0 0.0
    %937 = vmatpush2.msra.mxu0 0.0
    %938 = vmatprep.subr.mxu0 0.0
    %939 = vmatpush2.msra.mxu0 0.0
    %940 = vmatprep.subr.mxu0 0.0
    %941 = vmatpush2.msra.mxu0 0.0
    %942 = vmatprep.subr.mxu0 0.0
    %943 = vmatpush2.msra.mxu0 0.0
    %944 = vmatprep.subr.mxu0 0.0
    %945 = vmatpush2.msra.mxu0 0.0
    %946 = vmatprep.subr.mxu0 0.0
    %947 = vmatpush2.msra.mxu0 0.0
    %948 = vmatprep.mubr.f32.mxu0 0.0
    %949 = vmatmul.mubr.f32.gmra.mxu0 %v882
    %v950 = vpop.f32.mrf.mxu0
    %v951 = vadd.f32 0.0, %v950
    %v952 = vpop.f32.mrf.mxu0
    %953 = vdwg.mxu0
    %v955 = vrot.slane %v951, 2
    %v957 = vadd.f32 %v139, %v955
    %v958 = vxor.u32 %v957, 2147483648
    %v959 = vmul.f32 %v958, 1.442695
    %v960 = vpow.pop %v959
    %v961 = vadd.f32 %v960, 1.0
    %v962 = vrcp.pop %v961
    %v963 = vmul.f32 1.0, %v962
    %v964 = vtanh.pop %v957
    %v966 = vrot.slane %v871, 6
    %v968 = vmul.f32 %v963, %v966
    %970 = vrot.lane.b32.xlu0 %v964, 64
    %v971 = vpop.permute.xlu0 %970
    %v973 = vmul.f32 %v963, %v971
    %975 = vrot.lane.b32.xlu0 %v973, 32
    %v976 = vpop.permute.xlu0 %975
    %v978 = vadd.f32 %v968, %v976
    %v979 = vtanh.pop %v978
    %981 = vrot.lane.b32.xlu0 %v979, 64
    %v982 = vpop.permute.xlu0 %981
    %v984 = vmul.f32 %v963, %v982
    %vm985 = vcmask 1041408
    %v986 = vsel %vm985, %v240, %v346
    %vm987 = vcmask 1043456
    %v988 = vsel %vm987, %v986, %v453
    %vm989 = vcmask 1045504
    %v990 = vsel %vm989, %v988, %v560
    %v991 = vsel %vm985, %v664, %v770
    %v992 = vsel %vm987, %v991, %v877
    %v993 = vsel %vm989, %v992, %v984
    %v994 = vld [vmem:[%s4] sm:$0xff]
    %v995 = vld [vmem:[%s4 + $0x8] sm:$0xff]
    %v996 = vld [vmem:[%s4 + $0x10] sm:$0xff]
    %v997 = vld [vmem:[%s4 + $0x18] sm:$0xff]
    %v998 = vld [vmem:[#allocation2] sm:$0xff]
    %v999 = vld [vmem:[#allocation2 + $0x8] sm:$0xff]
    %v1000 = vld [vmem:[#allocation2 + $0x10] sm:$0xff]
    %v1001 = vld [vmem:[#allocation2 + $0x18] sm:$0xff]
    %v1002 = vld [vmem:[%s6] sm:$0x1]
    %v1004 = vlaneseq
    %v1005 = vshrl.u32 %v1004, 7
    %v1006 = vsub.s32 0, %v1005
    %v1007 = vrot.slane %v1002, %v1006
    %1011 = vrot.lane.b32.xlu0 %v990, 32
    %v1012 = vpop.permute.xlu0 %1011
    %1013 = vrot.lane.b32.xlu0 %v993, 32
    %v1014 = vpop.permute.xlu0 %1013
    %v1015 = vsel %vm142, %v1012, 0
    %v1017 = vsel %vm142, %v1014, 0
    %1019 = vmatprep.subr.mxu0 0.0
    %1020 = vmatpush1.msra.mxu0 0.0
    %1021 = vmatprep.subr.mxu0 0.0
    %1022 = vmatpush1.msra.mxu0 0.0
    %1023 = vmatprep.subr.mxu0 0.0
    %1024 = vmatpush1.msra.mxu0 0.0
    %1025 = vmatprep.subr.mxu0 0.0
    %1026 = vmatpush1.msra.mxu0 0.0
    %1027 = vmatprep.subr.mxu0 0.0
    %1028 = vmatpush1.msra.mxu0 0.0
    %1029 = vmatprep.subr.mxu0 0.0
    %1030 = vmatpush1.msra.mxu0 0.0
    %1031 = vmatprep.subr.mxu0 0.0
    %1032 = vmatpush1.msra.mxu0 0.0
    %1033 = vmatprep.subr.mxu0 0.0
    %1034 = vmatpush1.msra.mxu0 0.0
    %1035 = vmatprep.subr.mxu0 0.0
    %1036 = vmatpush1.msra.mxu0 0.0
    %1037 = vmatprep.subr.mxu0 0.0
    %1038 = vmatpush1.msra.mxu0 0.0
    %1039 = vmatprep.subr.mxu0 0.0
    %1040 = vmatpush1.msra.mxu0 0.0
    %1041 = vmatprep.subr.mxu0 0.0
    %1042 = vmatpush1.msra.mxu0 0.0
    %1043 = vmatprep.subr.mxu0 0.0
    %1044 = vmatpush1.msra.mxu0 %v997
    %1045 = vmatprep.subr.mxu0 0.0
    %1046 = vmatpush1.msra.mxu0 %v996
    %1047 = vmatprep.subr.mxu0 0.0
    %1048 = vmatpush1.msra.mxu0 %v995
    %1049 = vmatprep.subr.mxu0 0.0
    %1050 = vmatpush1.msra.mxu0 %v994
    %1051 = vmatprep.subr.mxu0 0.0
    %1052 = vmatpush2.msra.mxu0 0.0
    %1053 = vmatprep.subr.mxu0 0.0
    %1054 = vmatpush2.msra.mxu0 0.0
    %1055 = vmatprep.subr.mxu0 0.0
    %1056 = vmatpush2.msra.mxu0 0.0
    %1057 = vmatprep.subr.mxu0 0.0
    %1058 = vmatpush2.msra.mxu0 0.0
    %1059 = vmatprep.subr.mxu0 0.0
    %1060 = vmatpush2.msra.mxu0 0.0
    %1061 = vmatprep.subr.mxu0 0.0
    %1062 = vmatpush2.msra.mxu0 0.0
    %1063 = vmatprep.subr.mxu0 0.0
    %1064 = vmatpush2.msra.mxu0 0.0
    %1065 = vmatprep.subr.mxu0 0.0
    %1066 = vmatpush2.msra.mxu0 0.0
    %1067 = vmatprep.subr.mxu0 0.0
    %1068 = vmatpush2.msra.mxu0 0.0
    %1069 = vmatprep.subr.mxu0 0.0
    %1070 = vmatpush2.msra.mxu0 0.0
    %1071 = vmatprep.subr.mxu0 0.0
    %1072 = vmatpush2.msra.mxu0 0.0
    %1073 = vmatprep.subr.mxu0 0.0
    %1074 = vmatpush2.msra.mxu0 0.0
    %1075 = vmatprep.subr.mxu0 0.0
    %1076 = vmatpush2.msra.mxu0 0.0
    %1077 = vmatprep.subr.mxu0 0.0
    %1078 = vmatpush2.msra.mxu0 0.0
    %1079 = vmatprep.subr.mxu0 0.0
    %1080 = vmatpush2.msra.mxu0 0.0
    %1081 = vmatprep.subr.mxu0 0.0
    %1082 = vmatpush2.msra.mxu0 0.0
    %1083 = vmatprep.mubr.f32.mxu0 0.0
    %1084 = vmatmul.mubr.f32.gmra.mxu0 %v1015
    %v1085 = vpop.f32.mrf.mxu0
    %v1086 = vadd.f32 %v1007, %v1085
    %v1087 = vpop.f32.mrf.mxu0
    %1088 = vmatprep.mubr.f32.mxu0 0.0
    %1089 = vmatmul.mubr.f32.gmra.mxu0 %v1017
    %v1090 = vpop.f32.mrf.mxu0
    %v1091 = vadd.f32 %v1007, %v1090
    %v1092 = vpop.f32.mrf.mxu0
    %1093 = vdwg.mxu0
    %1094 = vmatprep.subr.mxu0 0.0
    %1095 = vmatpush1.msra.mxu0 0.0
    %1096 = vmatprep.subr.mxu0 0.0
    %1097 = vmatpush1.msra.mxu0 0.0
    %1098 = vmatprep.subr.mxu0 0.0
    %1099 = vmatpush1.msra.mxu0 0.0
    %1100 = vmatprep.subr.mxu0 0.0
    %1101 = vmatpush1.msra.mxu0 0.0
    %1102 = vmatprep.subr.mxu0 0.0
    %1103 = vmatpush1.msra.mxu0 0.0
    %1104 = vmatprep.subr.mxu0 0.0
    %1105 = vmatpush1.msra.mxu0 0.0
    %1106 = vmatprep.subr.mxu0 0.0
    %1107 = vmatpush1.msra.mxu0 0.0
    %1108 = vmatprep.subr.mxu0 0.0
    %1109 = vmatpush1.msra.mxu0 0.0
    %1110 = vmatprep.subr.mxu0 0.0
    %1111 = vmatpush1.msra.mxu0 0.0
    %1112 = vmatprep.subr.mxu0 0.0
    %1113 = vmatpush1.msra.mxu0 0.0
    %1114 = vmatprep.subr.mxu0 0.0
    %1115 = vmatpush1.msra.mxu0 0.0
    %1116 = vmatprep.subr.mxu0 0.0
    %1117 = vmatpush1.msra.mxu0 0.0
    %1118 = vmatprep.subr.mxu0 0.0
    %1119 = vmatpush1.msra.mxu0 %v1001
    %1120 = vmatprep.subr.mxu0 0.0
    %1121 = vmatpush1.msra.mxu0 %v1000
    %1122 = vmatprep.subr.mxu0 0.0
    %1123 = vmatpush1.msra.mxu0 %v999
    %1124 = vmatprep.subr.mxu0 0.0
    %1125 = vmatpush1.msra.mxu0 %v998
    %1126 = vmatprep.subr.mxu0 0.0
    %1127 = vmatpush2.msra.mxu0 0.0
    %1128 = vmatprep.subr.mxu0 0.0
    %1129 = vmatpush2.msra.mxu0 0.0
    %1130 = vmatprep.subr.mxu0 0.0
    %1131 = vmatpush2.msra.mxu0 0.0
    %1132 = vmatprep.subr.mxu0 0.0
    %1133 = vmatpush2.msra.mxu0 0.0
    %1134 = vmatprep.subr.mxu0 0.0
    %1135 = vmatpush2.msra.mxu0 0.0
    %1136 = vmatprep.subr.mxu0 0.0
    %1137 = vmatpush2.msra.mxu0 0.0
    %1138 = vmatprep.subr.mxu0 0.0
    %1139 = vmatpush2.msra.mxu0 0.0
    %1140 = vmatprep.subr.mxu0 0.0
    %1141 = vmatpush2.msra.mxu0 0.0
    %1142 = vmatprep.subr.mxu0 0.0
    %1143 = vmatpush2.msra.mxu0 0.0
    %1144 = vmatprep.subr.mxu0 0.0
    %1145 = vmatpush2.msra.mxu0 0.0
    %1146 = vmatprep.subr.mxu0 0.0
    %1147 = vmatpush2.msra.mxu0 0.0
    %1148 = vmatprep.subr.mxu0 0.0
    %1149 = vmatpush2.msra.mxu0 0.0
    %1150 = vmatprep.subr.mxu0 0.0
    %1151 = vmatpush2.msra.mxu0 0.0
    %1152 = vmatprep.subr.mxu0 0.0
    %1153 = vmatpush2.msra.mxu0 0.0
    %1154 = vmatprep.subr.mxu0 0.0
    %1155 = vmatpush2.msra.mxu0 0.0
    %1156 = vmatprep.subr.mxu0 0.0
    %1157 = vmatpush2.msra.mxu0 0.0
    %1158 = vmatprep.mubr.f32.mxu0 0.0
    %1159 = vmatmul.mubr.f32.gmra.mxu0 %v144
    %v1160 = vpop.f32.mrf.mxu0
    %v1161 = vadd.f32 0.0, %v1160
    %v1162 = vpop.f32.mrf.mxu0
    %1163 = vdwg.mxu0
    %v1164 = vadd.f32 %v1086, %v1161
    %v1165 = vxor.u32 %v1164, 2147483648
    %v1166 = vmul.f32 %v1165, 1.442695
    %v1167 = vpow.pop %v1166
    %v1168 = vadd.f32 %v1167, 1.0
    %v1169 = vrcp.pop %v1168
    %v1170 = vmul.f32 1.0, %v1169
    %v1171 = vtanh.pop %v1164
    %v1172 = vmul.f32 %v1170, 0.0
    %1174 = vrot.lane.b32.xlu0 %v1171, 64
    %v1175 = vpop.permute.xlu0 %1174
    %v1177 = vmul.f32 %v1170, %v1175
    %1179 = vrot.lane.b32.xlu0 %v1177, 32
    %v1180 = vpop.permute.xlu0 %1179
    %v1182 = vadd.f32 %v1172, %v1180
    %v1183 = vtanh.pop %v1182
    %1185 = vrot.lane.b32.xlu0 %v1183, 64
    %v1186 = vpop.permute.xlu0 %1185
    %v1188 = vmul.f32 %v1170, %v1186
    %1190 = vrot.lane.b32.xlu0 %v1188, 32
    %v1191 = vpop.permute.xlu0 %1190
    %v1192 = vsel %vm142, %v1191, 0
    %1194 = vmatprep.subr.mxu0 0.0
    %1195 = vmatpush1.msra.mxu0 0.0
    %1196 = vmatprep.subr.mxu0 0.0
    %1197 = vmatpush1.msra.mxu0 0.0
    %1198 = vmatprep.subr.mxu0 0.0
    %1199 = vmatpush1.msra.mxu0 0.0
    %1200 = vmatprep.subr.mxu0 0.0
    %1201 = vmatpush1.msra.mxu0 0.0
    %1202 = vmatprep.subr.mxu0 0.0
    %1203 = vmatpush1.msra.mxu0 0.0
    %1204 = vmatprep.subr.mxu0 0.0
    %1205 = vmatpush1.msra.mxu0 0.0
    %1206 = vmatprep.subr.mxu0 0.0
    %1207 = vmatpush1.msra.mxu0 0.0
    %1208 = vmatprep.subr.mxu0 0.0
    %1209 = vmatpush1.msra.mxu0 0.0
    %1210 = vmatprep.subr.mxu0 0.0
    %1211 = vmatpush1.msra.mxu0 0.0
    %1212 = vmatprep.subr.mxu0 0.0
    %1213 = vmatpush1.msra.mxu0 0.0
    %1214 = vmatprep.subr.mxu0 0.0
    %1215 = vmatpush1.msra.mxu0 0.0
    %1216 = vmatprep.subr.mxu0 0.0
    %1217 = vmatpush1.msra.mxu0 0.0
    %1218 = vmatprep.subr.mxu0 0.0
    %1219 = vmatpush1.msra.mxu0 %v1001
    %1220 = vmatprep.subr.mxu0 0.0
    %1221 = vmatpush1.msra.mxu0 %v1000
    %1222 = vmatprep.subr.mxu0 0.0
    %1223 = vmatpush1.msra.mxu0 %v999
    %1224 = vmatprep.subr.mxu0 0.0
    %1225 = vmatpush1.msra.mxu0 %v998
    %1226 = vmatprep.subr.mxu0 0.0
    %1227 = vmatpush2.msra.mxu0 0.0
    %1228 = vmatprep.subr.mxu0 0.0
    %1229 = vmatpush2.msra.mxu0 0.0
    %1230 = vmatprep.subr.mxu0 0.0
    %1231 = vmatpush2.msra.mxu0 0.0
    %1232 = vmatprep.subr.mxu0 0.0
    %1233 = vmatpush2.msra.mxu0 0.0
    %1234 = vmatprep.subr.mxu0 0.0
    %1235 = vmatpush2.msra.mxu0 0.0
    %1236 = vmatprep.subr.mxu0 0.0
    %1237 = vmatpush2.msra.mxu0 0.0
    %1238 = vmatprep.subr.mxu0 0.0
    %1239 = vmatpush2.msra.mxu0 0.0
    %1240 = vmatprep.subr.mxu0 0.0
    %1241 = vmatpush2.msra.mxu0 0.0
    %1242 = vmatprep.subr.mxu0 0.0
    %1243 = vmatpush2.msra.mxu0 0.0
    %1244 = vmatprep.subr.mxu0 0.0
    %1245 = vmatpush2.msra.mxu0 0.0
    %1246 = vmatprep.subr.mxu0 0.0
    %1247 = vmatpush2.msra.mxu0 0.0
    %1248 = vmatprep.subr.mxu0 0.0
    %1249 = vmatpush2.msra.mxu0 0.0
    %1250 = vmatprep.subr.mxu0 0.0
    %1251 = vmatpush2.msra.mxu0 0.0
    %1252 = vmatprep.subr.mxu0 0.0
    %1253 = vmatpush2.msra.mxu0 0.0
    %1254 = vmatprep.subr.mxu0 0.0
    %1255 = vmatpush2.msra.mxu0 0.0
    %1256 = vmatprep.subr.mxu0 0.0
    %1257 = vmatpush2.msra.mxu0 0.0
    %1258 = vmatprep.mubr.f32.mxu0 0.0
    %1259 = vmatmul.mubr.f32.gmra.mxu0 %v1192
    %v1260 = vpop.f32.mrf.mxu0
    %v1261 = vadd.f32 0.0, %v1260
    %v1262 = vpop.f32.mrf.mxu0
    %1263 = vdwg.mxu0
    %v1265 = vrot.slane %v1261, 6
    %v1267 = vadd.f32 %v1086, %v1265
    %v1268 = vxor.u32 %v1267, 2147483648
    %v1269 = vmul.f32 %v1268, 1.442695
    %v1270 = vpow.pop %v1269
    %v1271 = vadd.f32 %v1270, 1.0
    %v1272 = vrcp.pop %v1271
    %v1273 = vmul.f32 1.0, %v1272
    %v1274 = vtanh.pop %v1267
    %v1276 = vrot.slane %v1182, 6
    %v1278 = vmul.f32 %v1273, %v1276
    %1280 = vrot.lane.b32.xlu0 %v1274, 64
    %v1281 = vpop.permute.xlu0 %1280
    %v1283 = vmul.f32 %v1273, %v1281
    %1285 = vrot.lane.b32.xlu0 %v1283, 32
    %v1286 = vpop.permute.xlu0 %1285
    %v1288 = vadd.f32 %v1278, %v1286
    %v1289 = vtanh.pop %v1288
    %1291 = vrot.lane.b32.xlu0 %v1289, 64
    %v1292 = vpop.permute.xlu0 %1291
    %v1294 = vmul.f32 %v1273, %v1292
    %v1296 = vrot.slane %v1294, 2
    %1297 = vrot.lane.b32.xlu0 %v1296, 32
    %v1298 = vpop.permute.xlu0 %1297
    %v1299 = vsel %vm142, %v1298, 0
    %1301 = vmatprep.subr.mxu0 0.0
    %1302 = vmatpush1.msra.mxu0 0.0
    %1303 = vmatprep.subr.mxu0 0.0
    %1304 = vmatpush1.msra.mxu0 0.0
    %1305 = vmatprep.subr.mxu0 0.0
    %1306 = vmatpush1.msra.mxu0 0.0
    %1307 = vmatprep.subr.mxu0 0.0
    %1308 = vmatpush1.msra.mxu0 0.0
    %1309 = vmatprep.subr.mxu0 0.0
    %1310 = vmatpush1.msra.mxu0 0.0
    %1311 = vmatprep.subr.mxu0 0.0
    %1312 = vmatpush1.msra.mxu0 0.0
    %1313 = vmatprep.subr.mxu0 0.0
    %1314 = vmatpush1.msra.mxu0 0.0
    %1315 = vmatprep.subr.mxu0 0.0
    %1316 = vmatpush1.msra.mxu0 0.0
    %1317 = vmatprep.subr.mxu0 0.0
    %1318 = vmatpush1.msra.mxu0 0.0
    %1319 = vmatprep.subr.mxu0 0.0
    %1320 = vmatpush1.msra.mxu0 0.0
    %1321 = vmatprep.subr.mxu0 0.0
    %1322 = vmatpush1.msra.mxu0 0.0
    %1323 = vmatprep.subr.mxu0 0.0
    %1324 = vmatpush1.msra.mxu0 0.0
    %1325 = vmatprep.subr.mxu0 0.0
    %1326 = vmatpush1.msra.mxu0 %v1001
    %1327 = vmatprep.subr.mxu0 0.0
    %1328 = vmatpush1.msra.mxu0 %v1000
    %1329 = vmatprep.subr.mxu0 0.0
    %1330 = vmatpush1.msra.mxu0 %v999
    %1331 = vmatprep.subr.mxu0 0.0
    %1332 = vmatpush1.msra.mxu0 %v998
    %1333 = vmatprep.subr.mxu0 0.0
    %1334 = vmatpush2.msra.mxu0 0.0
    %1335 = vmatprep.subr.mxu0 0.0
    %1336 = vmatpush2.msra.mxu0 0.0
    %1337 = vmatprep.subr.mxu0 0.0
    %1338 = vmatpush2.msra.mxu0 0.0
    %1339 = vmatprep.subr.mxu0 0.0
    %1340 = vmatpush2.msra.mxu0 0.0
    %1341 = vmatprep.subr.mxu0 0.0
    %1342 = vmatpush2.msra.mxu0 0.0
    %1343 = vmatprep.subr.mxu0 0.0
    %1344 = vmatpush2.msra.mxu0 0.0
    %1345 = vmatprep.subr.mxu0 0.0
    %1346 = vmatpush2.msra.mxu0 0.0
    %1347 = vmatprep.subr.mxu0 0.0
    %1348 = vmatpush2.msra.mxu0 0.0
    %1349 = vmatprep.subr.mxu0 0.0
    %1350 = vmatpush2.msra.mxu0 0.0
    %1351 = vmatprep.subr.mxu0 0.0
    %1352 = vmatpush2.msra.mxu0 0.0
    %1353 = vmatprep.subr.mxu0 0.0
    %1354 = vmatpush2.msra.mxu0 0.0
    %1355 = vmatprep.subr.mxu0 0.0
    %1356 = vmatpush2.msra.mxu0 0.0
    %1357 = vmatprep.subr.mxu0 0.0
    %1358 = vmatpush2.msra.mxu0 0.0
    %1359 = vmatprep.subr.mxu0 0.0
    %1360 = vmatpush2.msra.mxu0 0.0
    %1361 = vmatprep.subr.mxu0 0.0
    %1362 = vmatpush2.msra.mxu0 0.0
    %1363 = vmatprep.subr.mxu0 0.0
    %1364 = vmatpush2.msra.mxu0 0.0
    %1365 = vmatprep.mubr.f32.mxu0 0.0
    %1366 = vmatmul.mubr.f32.gmra.mxu0 %v1299
    %v1367 = vpop.f32.mrf.mxu0
    %v1368 = vadd.f32 0.0, %v1367
    %v1369 = vpop.f32.mrf.mxu0
    %1370 = vdwg.mxu0
    %v1372 = vrot.slane %v1368, 4
    %v1374 = vadd.f32 %v1086, %v1372
    %v1375 = vxor.u32 %v1374, 2147483648
    %v1376 = vmul.f32 %v1375, 1.442695
    %v1377 = vpow.pop %v1376
    %v1378 = vadd.f32 %v1377, 1.0
    %v1379 = vrcp.pop %v1378
    %v1380 = vmul.f32 1.0, %v1379
    %v1381 = vtanh.pop %v1374
    %v1383 = vrot.slane %v1288, 6
    %v1385 = vmul.f32 %v1380, %v1383
    %1387 = vrot.lane.b32.xlu0 %v1381, 64
    %v1388 = vpop.permute.xlu0 %1387
    %v1390 = vmul.f32 %v1380, %v1388
    %1392 = vrot.lane.b32.xlu0 %v1390, 32
    %v1393 = vpop.permute.xlu0 %1392
    %v1395 = vadd.f32 %v1385, %v1393
    %v1396 = vtanh.pop %v1395
    %1398 = vrot.lane.b32.xlu0 %v1396, 64
    %v1399 = vpop.permute.xlu0 %1398
    %v1401 = vmul.f32 %v1380, %v1399
    %v1403 = vrot.slane %v1401, 4
    %1404 = vrot.lane.b32.xlu0 %v1403, 32
    %v1405 = vpop.permute.xlu0 %1404
    %v1406 = vsel %vm142, %v1405, 0
    %1408 = vmatprep.subr.mxu0 0.0
    %1409 = vmatpush1.msra.mxu0 0.0
    %1410 = vmatprep.subr.mxu0 0.0
    %1411 = vmatpush1.msra.mxu0 0.0
    %1412 = vmatprep.subr.mxu0 0.0
    %1413 = vmatpush1.msra.mxu0 0.0
    %1414 = vmatprep.subr.mxu0 0.0
    %1415 = vmatpush1.msra.mxu0 0.0
    %1416 = vmatprep.subr.mxu0 0.0
    %1417 = vmatpush1.msra.mxu0 0.0
    %1418 = vmatprep.subr.mxu0 0.0
    %1419 = vmatpush1.msra.mxu0 0.0
    %1420 = vmatprep.subr.mxu0 0.0
    %1421 = vmatpush1.msra.mxu0 0.0
    %1422 = vmatprep.subr.mxu0 0.0
    %1423 = vmatpush1.msra.mxu0 0.0
    %1424 = vmatprep.subr.mxu0 0.0
    %1425 = vmatpush1.msra.mxu0 0.0
    %1426 = vmatprep.subr.mxu0 0.0
    %1427 = vmatpush1.msra.mxu0 0.0
    %1428 = vmatprep.subr.mxu0 0.0
    %1429 = vmatpush1.msra.mxu0 0.0
    %1430 = vmatprep.subr.mxu0 0.0
    %1431 = vmatpush1.msra.mxu0 0.0
    %1432 = vmatprep.subr.mxu0 0.0
    %1433 = vmatpush1.msra.mxu0 %v1001
    %1434 = vmatprep.subr.mxu0 0.0
    %1435 = vmatpush1.msra.mxu0 %v1000
    %1436 = vmatprep.subr.mxu0 0.0
    %1437 = vmatpush1.msra.mxu0 %v999
    %1438 = vmatprep.subr.mxu0 0.0
    %1439 = vmatpush1.msra.mxu0 %v998
    %1440 = vmatprep.subr.mxu0 0.0
    %1441 = vmatpush2.msra.mxu0 0.0
    %1442 = vmatprep.subr.mxu0 0.0
    %1443 = vmatpush2.msra.mxu0 0.0
    %1444 = vmatprep.subr.mxu0 0.0
    %1445 = vmatpush2.msra.mxu0 0.0
    %1446 = vmatprep.subr.mxu0 0.0
    %1447 = vmatpush2.msra.mxu0 0.0
    %1448 = vmatprep.subr.mxu0 0.0
    %1449 = vmatpush2.msra.mxu0 0.0
    %1450 = vmatprep.subr.mxu0 0.0
    %1451 = vmatpush2.msra.mxu0 0.0
    %1452 = vmatprep.subr.mxu0 0.0
    %1453 = vmatpush2.msra.mxu0 0.0
    %1454 = vmatprep.subr.mxu0 0.0
    %1455 = vmatpush2.msra.mxu0 0.0
    %1456 = vmatprep.subr.mxu0 0.0
    %1457 = vmatpush2.msra.mxu0 0.0
    %1458 = vmatprep.subr.mxu0 0.0
    %1459 = vmatpush2.msra.mxu0 0.0
    %1460 = vmatprep.subr.mxu0 0.0
    %1461 = vmatpush2.msra.mxu0 0.0
    %1462 = vmatprep.subr.mxu0 0.0
    %1463 = vmatpush2.msra.mxu0 0.0
    %1464 = vmatprep.subr.mxu0 0.0
    %1465 = vmatpush2.msra.mxu0 0.0
    %1466 = vmatprep.subr.mxu0 0.0
    %1467 = vmatpush2.msra.mxu0 0.0
    %1468 = vmatprep.subr.mxu0 0.0
    %1469 = vmatpush2.msra.mxu0 0.0
    %1470 = vmatprep.subr.mxu0 0.0
    %1471 = vmatpush2.msra.mxu0 0.0
    %1472 = vmatprep.mubr.f32.mxu0 0.0
    %1473 = vmatmul.mubr.f32.gmra.mxu0 %v1406
    %v1474 = vpop.f32.mrf.mxu0
    %v1475 = vadd.f32 0.0, %v1474
    %v1476 = vpop.f32.mrf.mxu0
    %1477 = vdwg.mxu0
    %v1479 = vrot.slane %v1475, 2
    %v1481 = vadd.f32 %v1086, %v1479
    %v1482 = vxor.u32 %v1481, 2147483648
    %v1483 = vmul.f32 %v1482, 1.442695
    %v1484 = vpow.pop %v1483
    %v1485 = vadd.f32 %v1484, 1.0
    %v1486 = vrcp.pop %v1485
    %v1487 = vmul.f32 1.0, %v1486
    %v1488 = vtanh.pop %v1481
    %v1490 = vrot.slane %v1395, 6
    %v1492 = vmul.f32 %v1487, %v1490
    %1494 = vrot.lane.b32.xlu0 %v1488, 64
    %v1495 = vpop.permute.xlu0 %1494
    %v1497 = vmul.f32 %v1487, %v1495
    %1499 = vrot.lane.b32.xlu0 %v1497, 32
    %v1500 = vpop.permute.xlu0 %1499
    %v1502 = vadd.f32 %v1492, %v1500
    %v1503 = vtanh.pop %v1502
    %1505 = vrot.lane.b32.xlu0 %v1503, 64
    %v1506 = vpop.permute.xlu0 %1505
    %v1508 = vmul.f32 %v1487, %v1506
    %v1510 = vrot.slane %v1508, 6
    %1511 = vrot.lane.b32.xlu0 %v1510, 32
    %v1512 = vpop.permute.xlu0 %1511
    %v1513 = vsel %vm142, %v1512, 0
    %1515 = vmatprep.subr.mxu0 0.0
    %1516 = vmatpush1.msra.mxu0 0.0
    %1517 = vmatprep.subr.mxu0 0.0
    %1518 = vmatpush1.msra.mxu0 0.0
    %1519 = vmatprep.subr.mxu0 0.0
    %1520 = vmatpush1.msra.mxu0 0.0
    %1521 = vmatprep.subr.mxu0 0.0
    %1522 = vmatpush1.msra.mxu0 0.0
    %1523 = vmatprep.subr.mxu0 0.0
    %1524 = vmatpush1.msra.mxu0 0.0
    %1525 = vmatprep.subr.mxu0 0.0
    %1526 = vmatpush1.msra.mxu0 0.0
    %1527 = vmatprep.subr.mxu0 0.0
    %1528 = vmatpush1.msra.mxu0 0.0
    %1529 = vmatprep.subr.mxu0 0.0
    %1530 = vmatpush1.msra.mxu0 0.0
    %1531 = vmatprep.subr.mxu0 0.0
    %1532 = vmatpush1.msra.mxu0 0.0
    %1533 = vmatprep.subr.mxu0 0.0
    %1534 = vmatpush1.msra.mxu0 0.0
    %1535 = vmatprep.subr.mxu0 0.0
    %1536 = vmatpush1.msra.mxu0 0.0
    %1537 = vmatprep.subr.mxu0 0.0
    %1538 = vmatpush1.msra.mxu0 0.0
    %1539 = vmatprep.subr.mxu0 0.0
    %1540 = vmatpush1.msra.mxu0 %v1001
    %1541 = vmatprep.subr.mxu0 0.0
    %1542 = vmatpush1.msra.mxu0 %v1000
    %1543 = vmatprep.subr.mxu0 0.0
    %1544 = vmatpush1.msra.mxu0 %v999
    %1545 = vmatprep.subr.mxu0 0.0
    %1546 = vmatpush1.msra.mxu0 %v998
    %1547 = vmatprep.subr.mxu0 0.0
    %1548 = vmatpush2.msra.mxu0 0.0
    %1549 = vmatprep.subr.mxu0 0.0
    %1550 = vmatpush2.msra.mxu0 0.0
    %1551 = vmatprep.subr.mxu0 0.0
    %1552 = vmatpush2.msra.mxu0 0.0
    %1553 = vmatprep.subr.mxu0 0.0
    %1554 = vmatpush2.msra.mxu0 0.0
    %1555 = vmatprep.subr.mxu0 0.0
    %1556 = vmatpush2.msra.mxu0 0.0
    %1557 = vmatprep.subr.mxu0 0.0
    %1558 = vmatpush2.msra.mxu0 0.0
    %1559 = vmatprep.subr.mxu0 0.0
    %1560 = vmatpush2.msra.mxu0 0.0
    %1561 = vmatprep.subr.mxu0 0.0
    %1562 = vmatpush2.msra.mxu0 0.0
    %1563 = vmatprep.subr.mxu0 0.0
    %1564 = vmatpush2.msra.mxu0 0.0
    %1565 = vmatprep.subr.mxu0 0.0
    %1566 = vmatpush2.msra.mxu0 0.0
    %1567 = vmatprep.subr.mxu0 0.0
    %1568 = vmatpush2.msra.mxu0 0.0
    %1569 = vmatprep.subr.mxu0 0.0
    %1570 = vmatpush2.msra.mxu0 0.0
    %1571 = vmatprep.subr.mxu0 0.0
    %1572 = vmatpush2.msra.mxu0 0.0
    %1573 = vmatprep.subr.mxu0 0.0
    %1574 = vmatpush2.msra.mxu0 0.0
    %1575 = vmatprep.subr.mxu0 0.0
    %1576 = vmatpush2.msra.mxu0 0.0
    %1577 = vmatprep.subr.mxu0 0.0
    %1578 = vmatpush2.msra.mxu0 0.0
    %1579 = vmatprep.mubr.f32.mxu0 0.0
    %1580 = vmatmul.mubr.f32.gmra.mxu0 %v1513
    %v1581 = vpop.f32.mrf.mxu0
    %v1582 = vadd.f32 0.0, %v1581
    %v1583 = vpop.f32.mrf.mxu0
    %1584 = vdwg.mxu0
    %v1585 = vadd.f32 %v1091, %v1582
    %v1586 = vxor.u32 %v1585, 2147483648
    %v1587 = vmul.f32 %v1586, 1.442695
    %v1588 = vpow.pop %v1587
    %v1589 = vadd.f32 %v1588, 1.0
    %v1590 = vrcp.pop %v1589
    %v1591 = vmul.f32 1.0, %v1590
    %v1592 = vtanh.pop %v1585
    %v1594 = vrot.slane %v1502, 6
    %v1596 = vmul.f32 %v1591, %v1594
    %1598 = vrot.lane.b32.xlu0 %v1592, 64
    %v1599 = vpop.permute.xlu0 %1598
    %v1601 = vmul.f32 %v1591, %v1599
    %1603 = vrot.lane.b32.xlu0 %v1601, 32
    %v1604 = vpop.permute.xlu0 %1603
    %v1606 = vadd.f32 %v1596, %v1604
    %v1607 = vtanh.pop %v1606
    %1609 = vrot.lane.b32.xlu0 %v1607, 64
    %v1610 = vpop.permute.xlu0 %1609
    %v1612 = vmul.f32 %v1591, %v1610
    %1614 = vrot.lane.b32.xlu0 %v1612, 32
    %v1615 = vpop.permute.xlu0 %1614
    %v1616 = vsel %vm142, %v1615, 0
    %1618 = vmatprep.subr.mxu0 0.0
    %1619 = vmatpush1.msra.mxu0 0.0
    %1620 = vmatprep.subr.mxu0 0.0
    %1621 = vmatpush1.msra.mxu0 0.0
    %1622 = vmatprep.subr.mxu0 0.0
    %1623 = vmatpush1.msra.mxu0 0.0
    %1624 = vmatprep.subr.mxu0 0.0
    %1625 = vmatpush1.msra.mxu0 0.0
    %1626 = vmatprep.subr.mxu0 0.0
    %1627 = vmatpush1.msra.mxu0 0.0
    %1628 = vmatprep.subr.mxu0 0.0
    %1629 = vmatpush1.msra.mxu0 0.0
    %1630 = vmatprep.subr.mxu0 0.0
    %1631 = vmatpush1.msra.mxu0 0.0
    %1632 = vmatprep.subr.mxu0 0.0
    %1633 = vmatpush1.msra.mxu0 0.0
    %1634 = vmatprep.subr.mxu0 0.0
    %1635 = vmatpush1.msra.mxu0 0.0
    %1636 = vmatprep.subr.mxu0 0.0
    %1637 = vmatpush1.msra.mxu0 0.0
    %1638 = vmatprep.subr.mxu0 0.0
    %1639 = vmatpush1.msra.mxu0 0.0
    %1640 = vmatprep.subr.mxu0 0.0
    %1641 = vmatpush1.msra.mxu0 0.0
    %1642 = vmatprep.subr.mxu0 0.0
    %1643 = vmatpush1.msra.mxu0 %v1001
    %1644 = vmatprep.subr.mxu0 0.0
    %1645 = vmatpush1.msra.mxu0 %v1000
    %1646 = vmatprep.subr.mxu0 0.0
    %1647 = vmatpush1.msra.mxu0 %v999
    %1648 = vmatprep.subr.mxu0 0.0
    %1649 = vmatpush1.msra.mxu0 %v998
    %1650 = vmatprep.subr.mxu0 0.0
    %1651 = vmatpush2.msra.mxu0 0.0
    %1652 = vmatprep.subr.mxu0 0.0
    %1653 = vmatpush2.msra.mxu0 0.0
    %1654 = vmatprep.subr.mxu0 0.0
    %1655 = vmatpush2.msra.mxu0 0.0
    %1656 = vmatprep.subr.mxu0 0.0
    %1657 = vmatpush2.msra.mxu0 0.0
    %1658 = vmatprep.subr.mxu0 0.0
    %1659 = vmatpush2.msra.mxu0 0.0
    %1660 = vmatprep.subr.mxu0 0.0
    %1661 = vmatpush2.msra.mxu0 0.0
    %1662 = vmatprep.subr.mxu0 0.0
    %1663 = vmatpush2.msra.mxu0 0.0
    %1664 = vmatprep.subr.mxu0 0.0
    %1665 = vmatpush2.msra.mxu0 0.0
    %1666 = vmatprep.subr.mxu0 0.0
    %1667 = vmatpush2.msra.mxu0 0.0
    %1668 = vmatprep.subr.mxu0 0.0
    %1669 = vmatpush2.msra.mxu0 0.0
    %1670 = vmatprep.subr.mxu0 0.0
    %1671 = vmatpush2.msra.mxu0 0.0
    %1672 = vmatprep.subr.mxu0 0.0
    %1673 = vmatpush2.msra.mxu0 0.0
    %1674 = vmatprep.subr.mxu0 0.0
    %1675 = vmatpush2.msra.mxu0 0.0
    %1676 = vmatprep.subr.mxu0 0.0
    %1677 = vmatpush2.msra.mxu0 0.0
    %1678 = vmatprep.subr.mxu0 0.0
    %1679 = vmatpush2.msra.mxu0 0.0
    %1680 = vmatprep.subr.mxu0 0.0
    %1681 = vmatpush2.msra.mxu0 0.0
    %1682 = vmatprep.mubr.f32.mxu0 0.0
    %1683 = vmatmul.mubr.f32.gmra.mxu0 %v1616
    %v1684 = vpop.f32.mrf.mxu0
    %v1685 = vadd.f32 0.0, %v1684
    %v1686 = vpop.f32.mrf.mxu0
    %1687 = vdwg.mxu0
    %v1689 = vrot.slane %v1685, 6
    %v1691 = vadd.f32 %v1091, %v1689
    %v1692 = vxor.u32 %v1691, 2147483648
    %v1693 = vmul.f32 %v1692, 1.442695
    %v1694 = vpow.pop %v1693
    %v1695 = vadd.f32 %v1694, 1.0
    %v1696 = vrcp.pop %v1695
    %v1697 = vmul.f32 1.0, %v1696
    %v1698 = vtanh.pop %v1691
    %v1700 = vrot.slane %v1606, 6
    %v1702 = vmul.f32 %v1697, %v1700
    %1704 = vrot.lane.b32.xlu0 %v1698, 64
    %v1705 = vpop.permute.xlu0 %1704
    %v1707 = vmul.f32 %v1697, %v1705
    %1709 = vrot.lane.b32.xlu0 %v1707, 32
    %v1710 = vpop.permute.xlu0 %1709
    %v1712 = vadd.f32 %v1702, %v1710
    %v1713 = vtanh.pop %v1712
    %1715 = vrot.lane.b32.xlu0 %v1713, 64
    %v1716 = vpop.permute.xlu0 %1715
    %v1718 = vmul.f32 %v1697, %v1716
    %v1720 = vrot.slane %v1718, 2
    %1721 = vrot.lane.b32.xlu0 %v1720, 32
    %v1722 = vpop.permute.xlu0 %1721
    %v1723 = vsel %vm142, %v1722, 0
    %1725 = vmatprep.subr.mxu0 0.0
    %1726 = vmatpush1.msra.mxu0 0.0
    %1727 = vmatprep.subr.mxu0 0.0
    %1728 = vmatpush1.msra.mxu0 0.0
    %1729 = vmatprep.subr.mxu0 0.0
    %1730 = vmatpush1.msra.mxu0 0.0
    %1731 = vmatprep.subr.mxu0 0.0
    %1732 = vmatpush1.msra.mxu0 0.0
    %1733 = vmatprep.subr.mxu0 0.0
    %1734 = vmatpush1.msra.mxu0 0.0
    %1735 = vmatprep.subr.mxu0 0.0
    %1736 = vmatpush1.msra.mxu0 0.0
    %1737 = vmatprep.subr.mxu0 0.0
    %1738 = vmatpush1.msra.mxu0 0.0
    %1739 = vmatprep.subr.mxu0 0.0
    %1740 = vmatpush1.msra.mxu0 0.0
    %1741 = vmatprep.subr.mxu0 0.0
    %1742 = vmatpush1.msra.mxu0 0.0
    %1743 = vmatprep.subr.mxu0 0.0
    %1744 = vmatpush1.msra.mxu0 0.0
    %1745 = vmatprep.subr.mxu0 0.0
    %1746 = vmatpush1.msra.mxu0 0.0
    %1747 = vmatprep.subr.mxu0 0.0
    %1748 = vmatpush1.msra.mxu0 0.0
    %1749 = vmatprep.subr.mxu0 0.0
    %1750 = vmatpush1.msra.mxu0 %v1001
    %1751 = vmatprep.subr.mxu0 0.0
    %1752 = vmatpush1.msra.mxu0 %v1000
    %1753 = vmatprep.subr.mxu0 0.0
    %1754 = vmatpush1.msra.mxu0 %v999
    %1755 = vmatprep.subr.mxu0 0.0
    %1756 = vmatpush1.msra.mxu0 %v998
    %1757 = vmatprep.subr.mxu0 0.0
    %1758 = vmatpush2.msra.mxu0 0.0
    %1759 = vmatprep.subr.mxu0 0.0
    %1760 = vmatpush2.msra.mxu0 0.0
    %1761 = vmatprep.subr.mxu0 0.0
    %1762 = vmatpush2.msra.mxu0 0.0
    %1763 = vmatprep.subr.mxu0 0.0
    %1764 = vmatpush2.msra.mxu0 0.0
    %1765 = vmatprep.subr.mxu0 0.0
    %1766 = vmatpush2.msra.mxu0 0.0
    %1767 = vmatprep.subr.mxu0 0.0
    %1768 = vmatpush2.msra.mxu0 0.0
    %1769 = vmatprep.subr.mxu0 0.0
    %1770 = vmatpush2.msra.mxu0 0.0
    %1771 = vmatprep.subr.mxu0 0.0
    %1772 = vmatpush2.msra.mxu0 0.0
    %1773 = vmatprep.subr.mxu0 0.0
    %1774 = vmatpush2.msra.mxu0 0.0
    %1775 = vmatprep.subr.mxu0 0.0
    %1776 = vmatpush2.msra.mxu0 0.0
    %1777 = vmatprep.subr.mxu0 0.0
    %1778 = vmatpush2.msra.mxu0 0.0
    %1779 = vmatprep.subr.mxu0 0.0
    %1780 = vmatpush2.msra.mxu0 0.0
    %1781 = vmatprep.subr.mxu0 0.0
    %1782 = vmatpush2.msra.mxu0 0.0
    %1783 = vmatprep.subr.mxu0 0.0
    %1784 = vmatpush2.msra.mxu0 0.0
    %1785 = vmatprep.subr.mxu0 0.0
    %1786 = vmatpush2.msra.mxu0 0.0
    %1787 = vmatprep.subr.mxu0 0.0
    %1788 = vmatpush2.msra.mxu0 0.0
    %1789 = vmatprep.mubr.f32.mxu0 0.0
    %1790 = vmatmul.mubr.f32.gmra.mxu0 %v1723
    %v1791 = vpop.f32.mrf.mxu0
    %v1792 = vadd.f32 0.0, %v1791
    %v1793 = vpop.f32.mrf.mxu0
    %1794 = vdwg.mxu0
    %v1796 = vrot.slane %v1792, 4
    %v1798 = vadd.f32 %v1091, %v1796
    %v1799 = vxor.u32 %v1798, 2147483648
    %v1800 = vmul.f32 %v1799, 1.442695
    %v1801 = vpow.pop %v1800
    %v1802 = vadd.f32 %v1801, 1.0
    %v1803 = vrcp.pop %v1802
    %v1804 = vmul.f32 1.0, %v1803
    %v1805 = vtanh.pop %v1798
    %v1807 = vrot.slane %v1712, 6
    %v1809 = vmul.f32 %v1804, %v1807
    %1811 = vrot.lane.b32.xlu0 %v1805, 64
    %v1812 = vpop.permute.xlu0 %1811
    %v1814 = vmul.f32 %v1804, %v1812
    %1816 = vrot.lane.b32.xlu0 %v1814, 32
    %v1817 = vpop.permute.xlu0 %1816
    %v1819 = vadd.f32 %v1809, %v1817
    %v1820 = vtanh.pop %v1819
    %1822 = vrot.lane.b32.xlu0 %v1820, 64
    %v1823 = vpop.permute.xlu0 %1822
    %v1825 = vmul.f32 %v1804, %v1823
    %v1827 = vrot.slane %v1825, 4
    %1828 = vrot.lane.b32.xlu0 %v1827, 32
    %v1829 = vpop.permute.xlu0 %1828
    %v1830 = vsel %vm142, %v1829, 0
    %1832 = vmatprep.subr.mxu0 0.0
    %1833 = vmatpush1.msra.mxu0 0.0
    %1834 = vmatprep.subr.mxu0 0.0
    %1835 = vmatpush1.msra.mxu0 0.0
    %1836 = vmatprep.subr.mxu0 0.0
    %1837 = vmatpush1.msra.mxu0 0.0
    %1838 = vmatprep.subr.mxu0 0.0
    %1839 = vmatpush1.msra.mxu0 0.0
    %1840 = vmatprep.subr.mxu0 0.0
    %1841 = vmatpush1.msra.mxu0 0.0
    %1842 = vmatprep.subr.mxu0 0.0
    %1843 = vmatpush1.msra.mxu0 0.0
    %1844 = vmatprep.subr.mxu0 0.0
    %1845 = vmatpush1.msra.mxu0 0.0
    %1846 = vmatprep.subr.mxu0 0.0
    %1847 = vmatpush1.msra.mxu0 0.0
    %1848 = vmatprep.subr.mxu0 0.0
    %1849 = vmatpush1.msra.mxu0 0.0
    %1850 = vmatprep.subr.mxu0 0.0
    %1851 = vmatpush1.msra.mxu0 0.0
    %1852 = vmatprep.subr.mxu0 0.0
    %1853 = vmatpush1.msra.mxu0 0.0
    %1854 = vmatprep.subr.mxu0 0.0
    %1855 = vmatpush1.msra.mxu0 0.0
    %1856 = vmatprep.subr.mxu0 0.0
    %1857 = vmatpush1.msra.mxu0 %v1001
    %1858 = vmatprep.subr.mxu0 0.0
    %1859 = vmatpush1.msra.mxu0 %v1000
    %1860 = vmatprep.subr.mxu0 0.0
    %1861 = vmatpush1.msra.mxu0 %v999
    %1862 = vmatprep.subr.mxu0 0.0
    %1863 = vmatpush1.msra.mxu0 %v998
    %1864 = vmatprep.subr.mxu0 0.0
    %1865 = vmatpush2.msra.mxu0 0.0
    %1866 = vmatprep.subr.mxu0 0.0
    %1867 = vmatpush2.msra.mxu0 0.0
    %1868 = vmatprep.subr.mxu0 0.0
    %1869 = vmatpush2.msra.mxu0 0.0
    %1870 = vmatprep.subr.mxu0 0.0
    %1871 = vmatpush2.msra.mxu0 0.0
    %1872 = vmatprep.subr.mxu0 0.0
    %1873 = vmatpush2.msra.mxu0 0.0
    %1874 = vmatprep.subr.mxu0 0.0
    %1875 = vmatpush2.msra.mxu0 0.0
    %1876 = vmatprep.subr.mxu0 0.0
    %1877 = vmatpush2.msra.mxu0 0.0
    %1878 = vmatprep.subr.mxu0 0.0
    %1879 = vmatpush2.msra.mxu0 0.0
    %1880 = vmatprep.subr.mxu0 0.0
    %1881 = vmatpush2.msra.mxu0 0.0
    %1882 = vmatprep.subr.mxu0 0.0
    %1883 = vmatpush2.msra.mxu0 0.0
    %1884 = vmatprep.subr.mxu0 0.0
    %1885 = vmatpush2.msra.mxu0 0.0
    %1886 = vmatprep.subr.mxu0 0.0
    %1887 = vmatpush2.msra.mxu0 0.0
    %1888 = vmatprep.subr.mxu0 0.0
    %1889 = vmatpush2.msra.mxu0 0.0
    %1890 = vmatprep.subr.mxu0 0.0
    %1891 = vmatpush2.msra.mxu0 0.0
    %1892 = vmatprep.subr.mxu0 0.0
    %1893 = vmatpush2.msra.mxu0 0.0
    %1894 = vmatprep.subr.mxu0 0.0
    %1895 = vmatpush2.msra.mxu0 0.0
    %1896 = vmatprep.mubr.f32.mxu0 0.0
    %1897 = vmatmul.mubr.f32.gmra.mxu0 %v1830
    %v1898 = vpop.f32.mrf.mxu0
    %v1899 = vadd.f32 0.0, %v1898
    %v1900 = vpop.f32.mrf.mxu0
    %1901 = vdwg.mxu0
    %v1903 = vrot.slane %v1899, 2
    %v1905 = vadd.f32 %v1091, %v1903
    %v1906 = vxor.u32 %v1905, 2147483648
    %v1907 = vmul.f32 %v1906, 1.442695
    %v1908 = vpow.pop %v1907
    %v1909 = vadd.f32 %v1908, 1.0
    %v1910 = vrcp.pop %v1909
    %v1911 = vmul.f32 1.0, %v1910
    %v1912 = vtanh.pop %v1905
    %v1914 = vrot.slane %v1819, 6
    %v1916 = vmul.f32 %v1911, %v1914
    %1918 = vrot.lane.b32.xlu0 %v1912, 64
    %v1919 = vpop.permute.xlu0 %1918
    %v1921 = vmul.f32 %v1911, %v1919
    %1923 = vrot.lane.b32.xlu0 %v1921, 32
    %v1924 = vpop.permute.xlu0 %1923
    %v1926 = vadd.f32 %v1916, %v1924
    %v1927 = vtanh.pop %v1926
    %1929 = vrot.lane.b32.xlu0 %v1927, 64
    %v1930 = vpop.permute.xlu0 %1929
    %v1932 = vmul.f32 %v1911, %v1930
    %v1933 = vsel %vm985, %v1188, %v1294
    %v1934 = vsel %vm987, %v1933, %v1401
    %v1935 = vsel %vm989, %v1934, %v1508
    %v1936 = vsel %vm985, %v1612, %v1718
    %v1937 = vsel %vm987, %v1936, %v1825
    %v1938 = vsel %vm989, %v1937, %v1932
    %v1939 = vld [vmem:[%s7] sm:$0xff]
    %v1940 = vld [vmem:[%s7 + $0x8] sm:$0xff]
    %v1941 = vld [vmem:[%s7 + $0x10] sm:$0xff]
    %v1942 = vld [vmem:[%s7 + $0x18] sm:$0xff]
    %v1943 = vld [vmem:[%s8] sm:$0x1]
    %v1945 = vlaneseq
    %v1946 = vshrl.u32 %v1945, 7
    %v1947 = vsub.s32 0, %v1946
    %v1948 = vrot.slane %v1943, %v1947
    %1952 = vrot.lane.b32.xlu0 %v1935, 32
    %v1953 = vpop.permute.xlu0 %1952
    %1954 = vrot.lane.b32.xlu0 %v1938, 32
    %v1955 = vpop.permute.xlu0 %1954
    %v1956 = vsel %vm142, %v1953, 0
    %v1958 = vsel %vm142, %v1955, 0
    %1960 = vmatprep.subr.mxu0 0.0
    %1961 = vmatpush1.msra.mxu0 0.0
    %1962 = vmatprep.subr.mxu0 0.0
    %1963 = vmatpush1.msra.mxu0 0.0
    %1964 = vmatprep.subr.mxu0 0.0
    %1965 = vmatpush1.msra.mxu0 0.0
    %1966 = vmatprep.subr.mxu0 0.0
    %1967 = vmatpush1.msra.mxu0 0.0
    %1968 = vmatprep.subr.mxu0 0.0
    %1969 = vmatpush1.msra.mxu0 0.0
    %1970 = vmatprep.subr.mxu0 0.0
    %1971 = vmatpush1.msra.mxu0 0.0
    %1972 = vmatprep.subr.mxu0 0.0
    %1973 = vmatpush1.msra.mxu0 0.0
    %1974 = vmatprep.subr.mxu0 0.0
    %1975 = vmatpush1.msra.mxu0 0.0
    %1976 = vmatprep.subr.mxu0 0.0
    %1977 = vmatpush1.msra.mxu0 0.0
    %1978 = vmatprep.subr.mxu0 0.0
    %1979 = vmatpush1.msra.mxu0 0.0
    %1980 = vmatprep.subr.mxu0 0.0
    %1981 = vmatpush1.msra.mxu0 0.0
    %1982 = vmatprep.subr.mxu0 0.0
    %1983 = vmatpush1.msra.mxu0 0.0
    %1984 = vmatprep.subr.mxu0 0.0
    %1985 = vmatpush1.msra.mxu0 %v1942
    %1986 = vmatprep.subr.mxu0 0.0
    %1987 = vmatpush1.msra.mxu0 %v1941
    %1988 = vmatprep.subr.mxu0 0.0
    %1989 = vmatpush1.msra.mxu0 %v1940
    %1990 = vmatprep.subr.mxu0 0.0
    %1991 = vmatpush1.msra.mxu0 %v1939
    %1992 = vmatprep.subr.mxu0 0.0
    %1993 = vmatpush2.msra.mxu0 0.0
    %1994 = vmatprep.subr.mxu0 0.0
    %1995 = vmatpush2.msra.mxu0 0.0
    %1996 = vmatprep.subr.mxu0 0.0
    %1997 = vmatpush2.msra.mxu0 0.0
    %1998 = vmatprep.subr.mxu0 0.0
    %1999 = vmatpush2.msra.mxu0 0.0
    %2000 = vmatprep.subr.mxu0 0.0
    %2001 = vmatpush2.msra.mxu0 0.0
    %2002 = vmatprep.subr.mxu0 0.0
    %2003 = vmatpush2.msra.mxu0 0.0
    %2004 = vmatprep.subr.mxu0 0.0
    %2005 = vmatpush2.msra.mxu0 0.0
    %2006 = vmatprep.subr.mxu0 0.0
    %2007 = vmatpush2.msra.mxu0 0.0
    %2008 = vmatprep.subr.mxu0 0.0
    %2009 = vmatpush2.msra.mxu0 0.0
    %2010 = vmatprep.subr.mxu0 0.0
    %2011 = vmatpush2.msra.mxu0 0.0
    %2012 = vmatprep.subr.mxu0 0.0
    %2013 = vmatpush2.msra.mxu0 0.0
    %2014 = vmatprep.subr.mxu0 0.0
    %2015 = vmatpush2.msra.mxu0 0.0
    %2016 = vmatprep.subr.mxu0 0.0
    %2017 = vmatpush2.msra.mxu0 0.0
    %2018 = vmatprep.subr.mxu0 0.0
    %2019 = vmatpush2.msra.mxu0 0.0
    %2020 = vmatprep.subr.mxu0 0.0
    %2021 = vmatpush2.msra.mxu0 0.0
    %2022 = vmatprep.subr.mxu0 0.0
    %2023 = vmatpush2.msra.mxu0 0.0
    %2024 = vmatprep.mubr.f32.mxu0 0.0
    %2025 = vmatmul.mubr.f32.gmra.mxu0 %v1956
    %v2026 = vpop.f32.mrf.mxu0
    %v2027 = vadd.f32 %v1948, %v2026
    %v2028 = vpop.f32.mrf.mxu0
    %2029 = vmatprep.mubr.f32.mxu0 0.0
    %2030 = vmatmul.mubr.f32.gmra.mxu0 %v1958
    %v2031 = vpop.f32.mrf.mxu0
    %v2032 = vadd.f32 %v1948, %v2031
    %v2033 = vpop.f32.mrf.mxu0
    %2034 = vdwg.mxu0
    %vm2035 = vcmask 31744
    %2036 = vst.msk [vmem:[%s9] sm:$0xff] %vm2035, %v2027
    %2037 = vst.msk [vmem:[%s9 + $0x8] sm:$0xff] %vm2035, %v2032
    // Predicated region
    $region42: #{net_forward.1} parent=1 // pred_check
      _
    $region43: #{net_forward.1} parent=1 // pred_check_branch
      %2039 = sbr.rel (0) target = $region45
    $region44: #{net_forward.1} parent=1 // pred_region
      _
    $region45: #{net_forward.1} parent=1 // pred_fallthru
      _
    // Predicated region
    $region46: #{net_forward.1} parent=1 // pred_check
      _
    $region47: #{net_forward.1} parent=1 // pred_check_branch
      %2041 = sbr.rel (0) target = $region49
    $region48: #{net_forward.1} parent=1 // pred_region
      _
    $region49: #{net_forward.1} parent=1 // pred_fallthru
      _
    %2042 = vsyncpa [#allocation3], 1

</llo_original>
